<compile_context>
chip_gen: v7x
topology: tpu7x:2x2x1
jax: 0.10.0
libtpu: 0.0.40
codegen_flags: <defaults>
</compile_context>

<pallas_src>
import functools

import numpy as np
import jax
import jax.numpy as jnp
from jax.experimental import pallas as pl
from jax.experimental.pallas import tpu as pltpu  # noqa: F401  (TPU backend import)


def _upsample_nearest2d_kernel(x_ref, o_ref, *, sh, sw):
    # x_ref: (NC*H, W) f32 ; o_ref: (NC*OH, OW) f32 with OH = sh*H, OW = sw*W.
    rows_in, w_in = x_ref.shape
    rows_out, w_out = o_ref.shape
    x = x_ref[...]

    # Column (W) repeat-by-sw as a 0/1 right-selection matrix, built in-kernel:
    #   R[w, p] = 1  iff  sw*w <= p < sw*(w+1)   (equivalently floor(p/sw) == w)
    w_i = jax.lax.broadcasted_iota(jnp.int32, (w_in, w_out), 0)
    p_i = jax.lax.broadcasted_iota(jnp.int32, (w_in, w_out), 1)
    r_sel = jnp.where((p_i >= w_i * sw) & (p_i < (w_i + 1) * sw), 1.0, 0.0)

    # Row (H) repeat-by-sh on the flattened (nc*H) row axis.  Since OH = sh*H, the
    # flattened output row q = nc*OH + oh reads source row floor(q/sh) = nc*H + floor(oh/sh),
    # so one banded 0/1 left-selection matrix covers every image in the batch:
    #   L[q, r] = 1  iff  sh*r <= q < sh*(r+1)
    q_i = jax.lax.broadcasted_iota(jnp.int32, (rows_out, rows_in), 0)
    r_i = jax.lax.broadcasted_iota(jnp.int32, (rows_out, rows_in), 1)
    l_sel = jnp.where((q_i >= r_i * sh) & (q_i < (r_i + 1) * sh), 1.0, 0.0)

    # Two tiny exact 0/1-selection matmuls (HIGHEST keeps the f32 payload bit-exact).
    tmp = jnp.dot(x, r_sel,
                  precision=jax.lax.Precision.HIGHEST,
                  preferred_element_type=jnp.float32)            # (NC*H, OW)
    out = jnp.dot(l_sel, tmp,
                  precision=jax.lax.Precision.HIGHEST,
                  preferred_element_type=jnp.float32)            # (NC*OH, OW)
    o_ref[...] = out.astype(o_ref.dtype)


@functools.partial(jax.jit, static_argnames=("output_size", "scales_h", "scales_w"))
def upsample_nearest2d(x, output_size=(18, 48), scales_h=3.0, scales_w=4.0):
    N, C, H, W = x.shape
    OH, OW = output_size
    NC = N * C

    # PyTorch nearest (scale-factor path): src = min(floor(dst * (1/scale)), in_size - 1).
    src_h = np.minimum(
        np.floor(np.arange(OH) * np.float32(1.0 / scales_h)).astype(np.int64), H - 1)
    src_w = np.minimum(
        np.floor(np.arange(OW) * np.float32(1.0 / scales_w)).astype(np.int64), W - 1)
    sh, sw = OH // H, OW // W
    # The banded in-kernel selection assumes an exact integer repeat (true for
    # output_size=[18,48], scales 3.0/4.0).  Verified at trace time, zero runtime cost.
    if (OH != sh * H or OW != sw * W
            or not np.array_equal(src_h, np.repeat(np.arange(H), sh))
            or not np.array_equal(src_w, np.repeat(np.arange(W), sw))):
        # TODO(synk): general (non-integer-ratio) nearest indexing not implemented here.
        raise NotImplementedError("only exact integer-ratio nearest upsampling supported")

    # TODO(synk): f64 -> f32 downcast (no f64 vectors on TPU).
    x = x.astype(jnp.float32)

    # Free metadata view of contiguous NCHW -> (NC*H, W).
    x2 = x.reshape(NC * H, W)

    out2 = pl.pallas_call(
        functools.partial(_upsample_nearest2d_kernel, sh=sh, sw=sw),
        out_shape=jax.ShapeDtypeStruct((NC * OH, OW), jnp.float32),
        # No grid: single whole-array invocation; blocks equal the full array dims.
        in_specs=[pl.BlockSpec((NC * H, W), lambda: (0, 0))],
        out_specs=pl.BlockSpec((NC * OH, OW), lambda: (0, 0)),
    )(x2)

    # Free metadata view back to NCHW.
    return out2.reshape(N, C, OH, OW)


if __name__ == "__main__":
    key = jax.random.PRNGKey(0)
    # output_size=[18, 48] with scales 3.0 / 4.0 implies input spatial (6, 12).
    N, C, H, W = 2, 4, 6, 12
    x = jax.random.uniform(key, (N, C, H, W), dtype=jnp.float32)

    out = upsample_nearest2d(x, output_size=(18, 48), scales_h=3.0, scales_w=4.0)
    out = jax.block_until_ready(out)
    assert out.shape == (N, C, 18, 48), out.shape

    # Reference nearest-neighbor check (pure numpy, PyTorch index formula).
    x_np = np.asarray(x)
    src_h = np.minimum(np.floor(np.arange(18) * np.float32(1.0 / 3.0)).astype(np.int64), H - 1)
    src_w = np.minimum(np.floor(np.arange(48) * np.float32(1.0 / 4.0)).astype(np.int64), W - 1)
    ref = x_np[:, :, src_h, :][:, :, :, src_w]
    np.testing.assert_allclose(np.asarray(out), ref, rtol=0, atol=0)

    print("KERNEL_OK")
</pallas_src>

<mosaic_0001>
module attributes {stable_mosaic.version = 11 : i64} {
  func.func @_upsample_nearest2d_kernel(%arg0: memref<48x12xf32, #tpu.memory_space<vmem>>, %arg1: memref<144x48xf32, #tpu.memory_space<vmem>>) attributes {dimension_semantics = [], scalar_prefetch = 0 : i64, scratch_operands = 0 : i64, tpu.core_type = #tpu.core_type<tc>} {
    %c0 = arith.constant 0 : index
    %c0_0 = arith.constant 0 : index
    %0 = vector.load %arg0[%c0, %c0_0] : memref<48x12xf32, #tpu.memory_space<vmem>>, vector<48x12xf32>
    %1 = tpu.iota {dimensions = array<i32: 0>} : vector<12x48xi32>
    %2 = tpu.iota {dimensions = array<i32: 1>} : vector<12x48xi32>
    %c4_i32 = arith.constant 4 : i32
    %3 = vector.broadcast %c4_i32 : i32 to vector<12x48xi32>
    %4 = arith.muli %1, %3 : vector<12x48xi32>
    %5 = arith.cmpi sge, %2, %4 : vector<12x48xi32>
    %c1_i32 = arith.constant 1 : i32
    %6 = vector.broadcast %c1_i32 : i32 to vector<12x48xi32>
    %7 = arith.addi %1, %6 : vector<12x48xi32>
    %c4_i32_1 = arith.constant 4 : i32
    %8 = vector.broadcast %c4_i32_1 : i32 to vector<12x48xi32>
    %9 = arith.muli %7, %8 : vector<12x48xi32>
    %10 = arith.cmpi slt, %2, %9 : vector<12x48xi32>
    %11 = arith.andi %5, %10 : vector<12x48xi1>
    %cst = arith.constant 1.000000e+00 : f32
    %cst_2 = arith.constant 0.000000e+00 : f32
    %12 = vector.broadcast %cst : f32 to vector<12x48xf32>
    %13 = vector.broadcast %cst_2 : f32 to vector<12x48xf32>
    %14 = arith.select %11, %12, %13 : vector<12x48xi1>, vector<12x48xf32>
    %15 = tpu.iota {dimensions = array<i32: 0>} : vector<144x48xi32>
    %16 = tpu.iota {dimensions = array<i32: 1>} : vector<144x48xi32>
    %c3_i32 = arith.constant 3 : i32
    %17 = vector.broadcast %c3_i32 : i32 to vector<144x48xi32>
    %18 = arith.muli %16, %17 : vector<144x48xi32>
    %19 = arith.cmpi sge, %15, %18 : vector<144x48xi32>
    %c1_i32_3 = arith.constant 1 : i32
    %20 = vector.broadcast %c1_i32_3 : i32 to vector<144x48xi32>
    %21 = arith.addi %16, %20 : vector<144x48xi32>
    %c3_i32_4 = arith.constant 3 : i32
    %22 = vector.broadcast %c3_i32_4 : i32 to vector<144x48xi32>
    %23 = arith.muli %21, %22 : vector<144x48xi32>
    %24 = arith.cmpi slt, %15, %23 : vector<144x48xi32>
    %25 = arith.andi %19, %24 : vector<144x48xi1>
    %cst_5 = arith.constant 1.000000e+00 : f32
    %cst_6 = arith.constant 0.000000e+00 : f32
    %26 = vector.broadcast %cst_5 : f32 to vector<144x48xf32>
    %27 = vector.broadcast %cst_6 : f32 to vector<144x48xf32>
    %28 = arith.select %25, %26, %27 : vector<144x48xi1>, vector<144x48xf32>
    %cst_7 = arith.constant dense<0.000000e+00> : vector<48x48xf32>
    %29 = tpu.matmul %0, %14, %cst_7 {dimension_numbers = #tpu.dot_dimension_numbers<[1], [0], [0], [1], [0, 0, 1, 1], [], []>, precision = #tpu.contract_precision<fp32>} : vector<48x12xf32>, vector<12x48xf32>, vector<48x48xf32> -> vector<48x48xf32>
    %cst_8 = arith.constant dense<0.000000e+00> : vector<144x48xf32>
    %30 = tpu.matmul %28, %29, %cst_8 {dimension_numbers = #tpu.dot_dimension_numbers<[1], [0], [0], [1], [0, 0, 1, 1], [], []>, precision = #tpu.contract_precision<fp32>} : vector<144x48xf32>, vector<48x48xf32>, vector<144x48xf32> -> vector<144x48xf32>
    %c0_9 = arith.constant 0 : index
    %c0_10 = arith.constant 0 : index
    %31 = vector.load %arg1[%c0_9, %c0_10] : memref<144x48xf32, #tpu.memory_space<vmem>>, vector<144x48xf32>
    tpu.vector_store %arg1[%c0_9, %c0_10], %30 {strides = array<i32>} : memref<144x48xf32, #tpu.memory_space<vmem>>, vector<144x48xf32>,
    return
  }
}

</mosaic_0001>

<llo_original>
// kernel: upsample_nearest2d.1
$region0: #{upsample_nearest2d.1}
  #allocation0 [shape = 'u32[]', space=smem, size = 0x4, offset = 0x4, fixed_abs, tag = 'smem constant byte address 0x4 - core index']
  #allocation1 [shape = 'u32[144,128]{1,0:T(1,128)}', space=vmem, size = 0x12000, scoped, tag = 'internal scratch']
  %s0 = inlined_call_operand.vmem [shape: f32[48,12], index: 0, kind: input, shape index: {}]
  %s1 = inlined_call_operand.vmem [shape: f32[144,48], index: 1, kind: output, shape index: {}]
  %s2 = sld [smem:[#allocation0]]
  $region14: #{upsample_nearest2d.1} parent=0
    _
  %s4 = ssub.s32 1, %s2
  %s5 = scalar_select 0, %s4, %s2
  // Predicated region
  $region2: #{upsample_nearest2d.1} parent=0 // pred_check
    _
  $region3: #{upsample_nearest2d.1} parent=0 // pred_check_branch
    %7 = sbr.rel (0) target = $region5
  $region4: #{upsample_nearest2d.1} parent=0 // pred_region
    _
  $region5: #{upsample_nearest2d.1} parent=0 // pred_fallthru
    _
  %v8 = vld [vmem:[%s0] sm:$0xff]
  %v9 = vld [vmem:[%s0 + $0x8] sm:$0xff]
  %v10 = vld [vmem:[%s0 + $0x10] sm:$0xff]
  %v11 = vld [vmem:[%s0 + $0x18] sm:$0xff]
  %v12 = vld [vmem:[%s0 + $0x20] sm:$0xff]
  %v13 = vld [vmem:[%s0 + $0x28] sm:$0xff]
  %v14 = vlaneseq
  %v15 = vshrl.u32 %v14, 7
  %v16 = vadd.s32 %v15, 8
  %v17 = vlaneseq
  %v18 = vand.u32 %v17, 127
  %v19 = vmul.u32 %v15, 4
  %v20 = vmul.u32 %v16, 4
  %vm21 = vcmp.ge.s32.totalorder %v18, %v19
  %vm22 = vcmp.ge.s32.totalorder %v18, %v20
  %v23 = vadd.s32 %v15, 1
  %v24 = vadd.s32 %v16, 1
  %v25 = vmul.u32 %v23, 4
  %v26 = vmul.u32 %v24, 4
  %vm27 = vcmp.lt.s32.totalorder %v18, %v25
  %vm28 = vcmp.lt.s32.totalorder %v18, %v26
  %vm29 = vmand %vm21, %vm27
  %vm30 = vmand %vm22, %vm28
  %v31 = vsel %vm29, 1.0, 0.0
  %v32 = vsel %vm30, 1.0, 0.0
  %v33 = vadd.s32 %v15, 16
  %v34 = vadd.s32 %v15, 24
  %v35 = vadd.s32 %v15, 32
  %v36 = vadd.s32 %v15, 40
  %v37 = vadd.s32 %v15, 48
  %v38 = vadd.s32 %v15, 56
  %v39 = vadd.s32 %v15, 64
  %v40 = vadd.s32 %v15, 72
  %v41 = vadd.s32 %v15, 80
  %v42 = vadd.s32 %v15, 88
  %v43 = vadd.s32 %v15, 96
  %v44 = vadd.s32 %v15, 104
  %v45 = vadd.s32 %v15, 112
  %v46 = vadd.s32 %v15, 120
  %v47 = vadd.s32 %v15, 128
  %v48 = vadd.s32 %v15, 136
  %v49 = vmul.u32 %v18, 3
  %vm50 = vcmp.ge.s32.totalorder %v15, %v49
  %vm51 = vcmp.ge.s32.totalorder %v16, %v49
  %vm52 = vcmp.ge.s32.totalorder %v33, %v49
  %vm53 = vcmp.ge.s32.totalorder %v34, %v49
  %vm54 = vcmp.ge.s32.totalorder %v35, %v49
  %vm55 = vcmp.ge.s32.totalorder %v36, %v49
  %vm56 = vcmp.ge.s32.totalorder %v37, %v49
  %vm57 = vcmp.ge.s32.totalorder %v38, %v49
  %vm58 = vcmp.ge.s32.totalorder %v39, %v49
  %vm59 = vcmp.ge.s32.totalorder %v40, %v49
  %vm60 = vcmp.ge.s32.totalorder %v41, %v49
  %vm61 = vcmp.ge.s32.totalorder %v42, %v49
  %vm62 = vcmp.ge.s32.totalorder %v43, %v49
  %vm63 = vcmp.ge.s32.totalorder %v44, %v49
  %vm64 = vcmp.ge.s32.totalorder %v45, %v49
  %vm65 = vcmp.ge.s32.totalorder %v46, %v49
  %vm66 = vcmp.ge.s32.totalorder %v47, %v49
  %vm67 = vcmp.ge.s32.totalorder %v48, %v49
  %v68 = vadd.s32 %v18, 1
  %v69 = vmul.u32 %v68, 3
  %vm70 = vcmp.lt.s32.totalorder %v15, %v69
  %vm71 = vcmp.lt.s32.totalorder %v16, %v69
  %vm72 = vcmp.lt.s32.totalorder %v33, %v69
  %vm73 = vcmp.lt.s32.totalorder %v34, %v69
  %vm74 = vcmp.lt.s32.totalorder %v35, %v69
  %vm75 = vcmp.lt.s32.totalorder %v36, %v69
  %vm76 = vcmp.lt.s32.totalorder %v37, %v69
  %vm77 = vcmp.lt.s32.totalorder %v38, %v69
  %vm78 = vcmp.lt.s32.totalorder %v39, %v69
  %vm79 = vcmp.lt.s32.totalorder %v40, %v69
  %vm80 = vcmp.lt.s32.totalorder %v41, %v69
  %vm81 = vcmp.lt.s32.totalorder %v42, %v69
  %vm82 = vcmp.lt.s32.totalorder %v43, %v69
  %vm83 = vcmp.lt.s32.totalorder %v44, %v69
  %vm84 = vcmp.lt.s32.totalorder %v45, %v69
  %vm85 = vcmp.lt.s32.totalorder %v46, %v69
  %vm86 = vcmp.lt.s32.totalorder %v47, %v69
  %vm87 = vcmp.lt.s32.totalorder %v48, %v69
  %vm88 = vmand %vm50, %vm70
  %vm89 = vmand %vm51, %vm71
  %vm90 = vmand %vm52, %vm72
  %vm91 = vmand %vm53, %vm73
  %vm92 = vmand %vm54, %vm74
  %vm93 = vmand %vm55, %vm75
  %vm94 = vmand %vm56, %vm76
  %vm95 = vmand %vm57, %vm77
  %vm96 = vmand %vm58, %vm78
  %vm97 = vmand %vm59, %vm79
  %vm98 = vmand %vm60, %vm80
  %vm99 = vmand %vm61, %vm81
  %vm100 = vmand %vm62, %vm82
  %vm101 = vmand %vm63, %vm83
  %vm102 = vmand %vm64, %vm84
  %vm103 = vmand %vm65, %vm85
  %vm104 = vmand %vm66, %vm86
  %vm105 = vmand %vm67, %vm87
  %v106 = vsel %vm88, 1.0, 0.0
  %v107 = vsel %vm89, 1.0, 0.0
  %v108 = vsel %vm90, 1.0, 0.0
  %v109 = vsel %vm91, 1.0, 0.0
  %v110 = vsel %vm92, 1.0, 0.0
  %v111 = vsel %vm93, 1.0, 0.0
  %v112 = vsel %vm94, 1.0, 0.0
  %v113 = vsel %vm95, 1.0, 0.0
  %v114 = vsel %vm96, 1.0, 0.0
  %v115 = vsel %vm97, 1.0, 0.0
  %v116 = vsel %vm98, 1.0, 0.0
  %v117 = vsel %vm99, 1.0, 0.0
  %v118 = vsel %vm100, 1.0, 0.0
  %v119 = vsel %vm101, 1.0, 0.0
  %v120 = vsel %vm102, 1.0, 0.0
  %v121 = vsel %vm103, 1.0, 0.0
  %v122 = vsel %vm104, 1.0, 0.0
  %v123 = vsel %vm105, 1.0, 0.0
  %vm124 = vcmask 97280
  %v126 = vsel %vm124, %v8, 0
  %v129 = vsel %vm124, %v9, 0
  %v132 = vsel %vm124, %v10, 0
  %v135 = vsel %vm124, %v11, 0
  %v138 = vsel %vm124, %v12, 0
  %v141 = vsel %vm124, %v13, 0
  %vm143 = vcmask 1043456
  %v145 = vsel %vm143, %v32, 0
  %147 = vmatprep.subr.mxu0 0.0
  %148 = vmatpush1.msra.mxu0 %v31
  %149 = vmatprep.subr.mxu0 0.0
  %v150 = vand.u32 %v145, 4294901760
  %151 = vmatpush1.msra.mxu0 %v150
  %152 = vmatprep.subr.mxu0 0.0
  %153 = vmatpush1.msra.mxu0 0.0
  %154 = vmatprep.subr.mxu0 0.0
  %155 = vmatpush1.msra.mxu0 0.0
  %156 = vmatprep.subr.mxu0 0.0
  %157 = vmatpush1.msra.mxu0 0.0
  %158 = vmatprep.subr.mxu0 0.0
  %159 = vmatpush1.msra.mxu0 0.0
  %160 = vmatprep.subr.mxu0 0.0
  %161 = vmatpush1.msra.mxu0 0.0
  %162 = vmatprep.subr.mxu0 0.0
  %163 = vmatpush1.msra.mxu0 0.0
  %164 = vmatprep.subr.mxu0 0.0
  %165 = vmatpush1.msra.mxu0 0.0
  %166 = vmatprep.subr.mxu0 0.0
  %167 = vmatpush1.msra.mxu0 0.0
  %168 = vmatprep.subr.mxu0 0.0
  %169 = vmatpush1.msra.mxu0 0.0
  %170 = vmatprep.subr.mxu0 0.0
  %171 = vmatpush1.msra.mxu0 0.0
  %172 = vmatprep.subr.mxu0 0.0
  %173 = vmatpush1.msra.mxu0 0.0
  %174 = vmatprep.subr.mxu0 0.0
  %175 = vmatpush1.msra.mxu0 0.0
  %176 = vmatprep.subr.mxu0 0.0
  %177 = vmatpush1.msra.mxu0 0.0
  %178 = vmatprep.subr.mxu0 0.0
  %179 = vmatpush1.msra.mxu0 0.0
  %180 = vmatprep.subr.mxu0 0.0
  %181 = vmatpush1.msra.mxu0 0.0
  %182 = vmatprep.subr.mxu0 0.0
  %183 = vmatpush1.msra.mxu0 0.0
  %184 = vmatprep.subr.mxu0 0.0
  %185 = vmatpush1.msra.mxu0 0.0
  %186 = vmatprep.subr.mxu0 0.0
  %187 = vmatpush1.msra.mxu0 0.0
  %188 = vmatprep.subr.mxu0 0.0
  %189 = vmatpush1.msra.mxu0 0.0
  %190 = vmatprep.subr.mxu0 0.0
  %191 = vmatpush1.msra.mxu0 0.0
  %192 = vmatprep.subr.mxu0 0.0
  %193 = vmatpush1.msra.mxu0 0.0
  %194 = vmatprep.subr.mxu0 0.0
  %195 = vmatpush1.msra.mxu0 0.0
  %196 = vmatprep.subr.mxu0 0.0
  %197 = vmatpush1.msra.mxu0 0.0
  %198 = vmatprep.subr.mxu0 0.0
  %199 = vmatpush1.msra.mxu0 0.0
  %200 = vmatprep.subr.mxu0 0.0
  %201 = vmatpush1.msra.mxu0 0.0
  %202 = vmatprep.subr.mxu0 0.0
  %203 = vmatpush1.msra.mxu0 0.0
  %204 = vmatprep.subr.mxu0 0.0
  %205 = vmatpush1.msra.mxu0 0.0
  %206 = vmatprep.subr.mxu0 0.0
  %207 = vmatpush1.msra.mxu0 0.0
  %208 = vmatprep.subr.mxu0 0.0
  %209 = vmatpush1.msra.mxu0 0.0
  %210 = vmatprep.subr.mxu0 0.0
  %211 = vmatpush1.msra.mxu0 0.0
  %212 = vmatprep.mubr.f32.mxu0 0.0
  %v213 = vand.u32 %v126, 4294901760
  %v214 = vsub.f32 %v126, %v213
  %v215 = vand.u32 %v214, 4294901760
  %v216 = vsub.f32 %v214, %v215
  %v217 = vand.u32 %v216, 4294901760
  %218 = vmatmul.mubr.f32.gmra.mrb[0].mxu0 %v217
  %v219 = vpop.f32.mrb[0].mxu0
  %v220 = vadd.f32 0.0, %v219
  %v221 = vpop.f32.mrb[0].mxu0
  %222 = vmatprep.mubr.f32.mxu0 0.0
  %v223 = vand.u32 %v129, 4294901760
  %v224 = vsub.f32 %v129, %v223
  %v225 = vand.u32 %v224, 4294901760
  %v226 = vsub.f32 %v224, %v225
  %v227 = vand.u32 %v226, 4294901760
  %228 = vmatmul.mubr.f32.gmra.mrb[0].mxu0 %v227
  %v229 = vpop.f32.mrb[0].mxu0
  %v230 = vadd.f32 0.0, %v229
  %v231 = vpop.f32.mrb[0].mxu0
  %232 = vmatprep.mubr.f32.mxu0 0.0
  %v233 = vand.u32 %v132, 4294901760
  %v234 = vsub.f32 %v132, %v233
  %v235 = vand.u32 %v234, 4294901760
  %v236 = vsub.f32 %v234, %v235
  %v237 = vand.u32 %v236, 4294901760
  %238 = vmatmul.mubr.f32.gmra.mrb[0].mxu0 %v237
  %v239 = vpop.f32.mrb[0].mxu0
  %v240 = vadd.f32 0.0, %v239
  %v241 = vpop.f32.mrb[0].mxu0
  %242 = vmatprep.mubr.f32.mxu0 0.0
  %v243 = vand.u32 %v135, 4294901760
  %v244 = vsub.f32 %v135, %v243
  %v245 = vand.u32 %v244, 4294901760
  %v246 = vsub.f32 %v244, %v245
  %v247 = vand.u32 %v246, 4294901760
  %248 = vmatmul.mubr.f32.gmra.mrb[0].mxu0 %v247
  %v249 = vpop.f32.mrb[0].mxu0
  %v250 = vadd.f32 0.0, %v249
  %v251 = vpop.f32.mrb[0].mxu0
  %252 = vmatprep.mubr.f32.mxu0 0.0
  %v253 = vand.u32 %v138, 4294901760
  %v254 = vsub.f32 %v138, %v253
  %v255 = vand.u32 %v254, 4294901760
  %v256 = vsub.f32 %v254, %v255
  %v257 = vand.u32 %v256, 4294901760
  %258 = vmatmul.mubr.f32.gmra.mrb[0].mxu0 %v257
  %v259 = vpop.f32.mrb[0].mxu0
  %v260 = vadd.f32 0.0, %v259
  %v261 = vpop.f32.mrb[0].mxu0
  %262 = vmatprep.mubr.f32.mxu0 0.0
  %v263 = vand.u32 %v141, 4294901760
  %v264 = vsub.f32 %v141, %v263
  %v265 = vand.u32 %v264, 4294901760
  %v266 = vsub.f32 %v264, %v265
  %v267 = vand.u32 %v266, 4294901760
  %268 = vmatmul.mubr.f32.gmra.mrb[0].mxu0 %v267
  %v269 = vpop.f32.mrb[0].mxu0
  %v270 = vadd.f32 0.0, %v269
  %v271 = vpop.f32.mrb[0].mxu0
  %272 = vdwg.mxu0
  %273 = vmatprep.subr.mxu0 0.0
  %v274 = vsub.f32 %v31, %v31
  %v275 = vand.u32 %v274, 4294901760
  %v276 = vsub.f32 %v274, %v275
  %v277 = vand.u32 %v276, 4294901760
  %278 = vmatpush1.msra.mxu0 %v277
  %279 = vmatprep.subr.mxu0 0.0
  %v280 = vand.u32 %v145, 4294901760
  %v281 = vsub.f32 %v145, %v280
  %v282 = vand.u32 %v281, 4294901760
  %v283 = vsub.f32 %v281, %v282
  %v284 = vand.u32 %v283, 4294901760
  %285 = vmatpush1.msra.mxu0 %v284
  %286 = vmatprep.subr.mxu0 0.0
  %287 = vmatpush1.msra.mxu0 0.0
  %288 = vmatprep.subr.mxu0 0.0
  %289 = vmatpush1.msra.mxu0 0.0
  %290 = vmatprep.subr.mxu0 0.0
  %291 = vmatpush1.msra.mxu0 0.0
  %292 = vmatprep.subr.mxu0 0.0
  %293 = vmatpush1.msra.mxu0 0.0
  %294 = vmatprep.subr.mxu0 0.0
  %295 = vmatpush1.msra.mxu0 0.0
  %296 = vmatprep.subr.mxu0 0.0
  %297 = vmatpush1.msra.mxu0 0.0
  %298 = vmatprep.subr.mxu0 0.0
  %299 = vmatpush1.msra.mxu0 0.0
  %300 = vmatprep.subr.mxu0 0.0
  %301 = vmatpush1.msra.mxu0 0.0
  %302 = vmatprep.subr.mxu0 0.0
  %303 = vmatpush1.msra.mxu0 0.0
  %304 = vmatprep.subr.mxu0 0.0
  %305 = vmatpush1.msra.mxu0 0.0
  %306 = vmatprep.subr.mxu0 0.0
  %307 = vmatpush1.msra.mxu0 0.0
  %308 = vmatprep.subr.mxu0 0.0
  %309 = vmatpush1.msra.mxu0 0.0
  %310 = vmatprep.subr.mxu0 0.0
  %311 = vmatpush1.msra.mxu0 0.0
  %312 = vmatprep.subr.mxu0 0.0
  %313 = vmatpush1.msra.mxu0 0.0
  %314 = vmatprep.subr.mxu0 0.0
  %315 = vmatpush1.msra.mxu0 0.0
  %316 = vmatprep.subr.mxu0 0.0
  %317 = vmatpush1.msra.mxu0 0.0
  %318 = vmatprep.subr.mxu0 0.0
  %319 = vmatpush1.msra.mxu0 0.0
  %320 = vmatprep.subr.mxu0 0.0
  %321 = vmatpush1.msra.mxu0 0.0
  %322 = vmatprep.subr.mxu0 0.0
  %323 = vmatpush1.msra.mxu0 0.0
  %324 = vmatprep.subr.mxu0 0.0
  %325 = vmatpush1.msra.mxu0 0.0
  %326 = vmatprep.subr.mxu0 0.0
  %327 = vmatpush1.msra.mxu0 0.0
  %328 = vmatprep.subr.mxu0 0.0
  %329 = vmatpush1.msra.mxu0 0.0
  %330 = vmatprep.subr.mxu0 0.0
  %331 = vmatpush1.msra.mxu0 0.0
  %332 = vmatprep.subr.mxu0 0.0
  %333 = vmatpush1.msra.mxu0 0.0
  %334 = vmatprep.subr.mxu0 0.0
  %335 = vmatpush1.msra.mxu0 0.0
  %336 = vmatprep.subr.mxu0 0.0
  %337 = vmatpush1.msra.mxu0 0.0
  %338 = vmatprep.subr.mxu0 0.0
  %339 = vmatpush1.msra.mxu0 0.0
  %340 = vmatprep.subr.mxu0 0.0
  %341 = vmatpush1.msra.mxu0 0.0
  %342 = vmatprep.subr.mxu0 0.0
  %343 = vmatpush1.msra.mxu0 0.0
  %344 = vmatprep.subr.mxu0 0.0
  %345 = vmatpush1.msra.mxu0 0.0
  %346 = vmatprep.mubr.f32.mxu0 0.0
  %v347 = vand.u32 %v126, 4294901760
  %348 = vmatmul.mubr.f32.gmra.mrb[0].mxu0 %v347
  %v349 = vpop.f32.mrb[0].mxu0
  %v350 = vadd.f32 %v220, %v349
  %v351 = vpop.f32.mrb[0].mxu0
  %352 = vmatprep.mubr.f32.mxu0 0.0
  %v353 = vand.u32 %v129, 4294901760
  %354 = vmatmul.mubr.f32.gmra.mrb[0].mxu0 %v353
  %v355 = vpop.f32.mrb[0].mxu0
  %v356 = vadd.f32 %v230, %v355
  %v357 = vpop.f32.mrb[0].mxu0
  %358 = vmatprep.mubr.f32.mxu0 0.0
  %v359 = vand.u32 %v132, 4294901760
  %360 = vmatmul.mubr.f32.gmra.mrb[0].mxu0 %v359
  %v361 = vpop.f32.mrb[0].mxu0
  %v362 = vadd.f32 %v240, %v361
  %v363 = vpop.f32.mrb[0].mxu0
  %364 = vmatprep.mubr.f32.mxu0 0.0
  %v365 = vand.u32 %v135, 4294901760
  %366 = vmatmul.mubr.f32.gmra.mrb[0].mxu0 %v365
  %v367 = vpop.f32.mrb[0].mxu0
  %v368 = vadd.f32 %v250, %v367
  %v369 = vpop.f32.mrb[0].mxu0
  %370 = vmatprep.mubr.f32.mxu0 0.0
  %v371 = vand.u32 %v138, 4294901760
  %372 = vmatmul.mubr.f32.gmra.mrb[0].mxu0 %v371
  %v373 = vpop.f32.mrb[0].mxu0
  %v374 = vadd.f32 %v260, %v373
  %v375 = vpop.f32.mrb[0].mxu0
  %376 = vmatprep.mubr.f32.mxu0 0.0
  %v377 = vand.u32 %v141, 4294901760
  %378 = vmatmul.mubr.f32.gmra.mrb[0].mxu0 %v377
  %v379 = vpop.f32.mrb[0].mxu0
  %v380 = vadd.f32 %v270, %v379
  %v381 = vpop.f32.mrb[0].mxu0
  %382 = vdwg.mxu0
  %383 = vmatprep.subr.mxu0 0.0
  %v384 = vsub.f32 %v31, %v31
  %385 = vmatpush1.msra.mxu0 %v384
  %386 = vmatprep.subr.mxu0 0.0
  %v387 = vand.u32 %v145, 4294901760
  %v388 = vsub.f32 %v145, %v387
  %389 = vmatpush1.msra.mxu0 %v388
  %390 = vmatprep.subr.mxu0 0.0
  %391 = vmatpush1.msra.mxu0 0.0
  %392 = vmatprep.subr.mxu0 0.0
  %393 = vmatpush1.msra.mxu0 0.0
  %394 = vmatprep.subr.mxu0 0.0
  %395 = vmatpush1.msra.mxu0 0.0
  %396 = vmatprep.subr.mxu0 0.0
  %397 = vmatpush1.msra.mxu0 0.0
  %398 = vmatprep.subr.mxu0 0.0
  %399 = vmatpush1.msra.mxu0 0.0
  %400 = vmatprep.subr.mxu0 0.0
  %401 = vmatpush1.msra.mxu0 0.0
  %402 = vmatprep.subr.mxu0 0.0
  %403 = vmatpush1.msra.mxu0 0.0
  %404 = vmatprep.subr.mxu0 0.0
  %405 = vmatpush1.msra.mxu0 0.0
  %406 = vmatprep.subr.mxu0 0.0
  %407 = vmatpush1.msra.mxu0 0.0
  %408 = vmatprep.subr.mxu0 0.0
  %409 = vmatpush1.msra.mxu0 0.0
  %410 = vmatprep.subr.mxu0 0.0
  %411 = vmatpush1.msra.mxu0 0.0
  %412 = vmatprep.subr.mxu0 0.0
  %413 = vmatpush1.msra.mxu0 0.0
  %414 = vmatprep.subr.mxu0 0.0
  %415 = vmatpush1.msra.mxu0 0.0
  %416 = vmatprep.subr.mxu0 0.0
  %417 = vmatpush1.msra.mxu0 0.0
  %418 = vmatprep.subr.mxu0 0.0
  %419 = vmatpush1.msra.mxu0 0.0
  %420 = vmatprep.subr.mxu0 0.0
  %421 = vmatpush1.msra.mxu0 0.0
  %422 = vmatprep.subr.mxu0 0.0
  %423 = vmatpush1.msra.mxu0 0.0
  %424 = vmatprep.subr.mxu0 0.0
  %425 = vmatpush1.msra.mxu0 0.0
  %426 = vmatprep.subr.mxu0 0.0
  %427 = vmatpush1.msra.mxu0 0.0
  %428 = vmatprep.subr.mxu0 0.0
  %429 = vmatpush1.msra.mxu0 0.0
  %430 = vmatprep.subr.mxu0 0.0
  %431 = vmatpush1.msra.mxu0 0.0
  %432 = vmatprep.subr.mxu0 0.0
  %433 = vmatpush1.msra.mxu0 0.0
  %434 = vmatprep.subr.mxu0 0.0
  %435 = vmatpush1.msra.mxu0 0.0
  %436 = vmatprep.subr.mxu0 0.0
  %437 = vmatpush1.msra.mxu0 0.0
  %438 = vmatprep.subr.mxu0 0.0
  %439 = vmatpush1.msra.mxu0 0.0
  %440 = vmatprep.subr.mxu0 0.0
  %441 = vmatpush1.msra.mxu0 0.0
  %442 = vmatprep.subr.mxu0 0.0
  %443 = vmatpush1.msra.mxu0 0.0
  %444 = vmatprep.subr.mxu0 0.0
  %445 = vmatpush1.msra.mxu0 0.0
  %446 = vmatprep.subr.mxu0 0.0
  %447 = vmatpush1.msra.mxu0 0.0
  %448 = vmatprep.subr.mxu0 0.0
  %449 = vmatpush1.msra.mxu0 0.0
  %450 = vmatprep.mubr.f32.mxu0 0.0
  %v451 = vand.u32 %v126, 4294901760
  %v452 = vsub.f32 %v126, %v451
  %453 = vmatmul.mubr.f32.gmra.mrb[0].mxu0 %v452
  %v454 = vpop.f32.mrb[0].mxu0
  %v455 = vadd.f32 %v350, %v454
  %v456 = vpop.f32.mrb[0].mxu0
  %457 = vmatprep.mubr.f32.mxu0 0.0
  %v458 = vand.u32 %v129, 4294901760
  %v459 = vsub.f32 %v129, %v458
  %460 = vmatmul.mubr.f32.gmra.mrb[0].mxu0 %v459
  %v461 = vpop.f32.mrb[0].mxu0
  %v462 = vadd.f32 %v356, %v461
  %v463 = vpop.f32.mrb[0].mxu0
  %464 = vmatprep.mubr.f32.mxu0 0.0
  %v465 = vand.u32 %v132, 4294901760
  %v466 = vsub.f32 %v132, %v465
  %467 = vmatmul.mubr.f32.gmra.mrb[0].mxu0 %v466
  %v468 = vpop.f32.mrb[0].mxu0
  %v469 = vadd.f32 %v362, %v468
  %v470 = vpop.f32.mrb[0].mxu0
  %471 = vmatprep.mubr.f32.mxu0 0.0
  %v472 = vand.u32 %v135, 4294901760
  %v473 = vsub.f32 %v135, %v472
  %474 = vmatmul.mubr.f32.gmra.mrb[0].mxu0 %v473
  %v475 = vpop.f32.mrb[0].mxu0
  %v476 = vadd.f32 %v368, %v475
  %v477 = vpop.f32.mrb[0].mxu0
  %478 = vmatprep.mubr.f32.mxu0 0.0
  %v479 = vand.u32 %v138, 4294901760
  %v480 = vsub.f32 %v138, %v479
  %481 = vmatmul.mubr.f32.gmra.mrb[0].mxu0 %v480
  %v482 = vpop.f32.mrb[0].mxu0
  %v483 = vadd.f32 %v374, %v482
  %v484 = vpop.f32.mrb[0].mxu0
  %485 = vmatprep.mubr.f32.mxu0 0.0
  %v486 = vand.u32 %v141, 4294901760
  %v487 = vsub.f32 %v141, %v486
  %488 = vmatmul.mubr.f32.gmra.mrb[0].mxu0 %v487
  %v489 = vpop.f32.mrb[0].mxu0
  %v490 = vadd.f32 %v380, %v489
  %v491 = vpop.f32.mrb[0].mxu0
  %492 = vdwg.mxu0
  %493 = vmatprep.subr.mxu0 0.0
  %494 = vmatpush1.msra.mxu0 %v31
  %495 = vmatprep.subr.mxu0 0.0
  %v496 = vand.u32 %v145, 4294901760
  %497 = vmatpush1.msra.mxu0 %v496
  %498 = vmatprep.subr.mxu0 0.0
  %499 = vmatpush1.msra.mxu0 0.0
  %500 = vmatprep.subr.mxu0 0.0
  %501 = vmatpush1.msra.mxu0 0.0
  %502 = vmatprep.subr.mxu0 0.0
  %503 = vmatpush1.msra.mxu0 0.0
  %504 = vmatprep.subr.mxu0 0.0
  %505 = vmatpush1.msra.mxu0 0.0
  %506 = vmatprep.subr.mxu0 0.0
  %507 = vmatpush1.msra.mxu0 0.0
  %508 = vmatprep.subr.mxu0 0.0
  %509 = vmatpush1.msra.mxu0 0.0
  %510 = vmatprep.subr.mxu0 0.0
  %511 = vmatpush1.msra.mxu0 0.0
  %512 = vmatprep.subr.mxu0 0.0
  %513 = vmatpush1.msra.mxu0 0.0
  %514 = vmatprep.subr.mxu0 0.0
  %515 = vmatpush1.msra.mxu0 0.0
  %516 = vmatprep.subr.mxu0 0.0
  %517 = vmatpush1.msra.mxu0 0.0
  %518 = vmatprep.subr.mxu0 0.0
  %519 = vmatpush1.msra.mxu0 0.0
  %520 = vmatprep.subr.mxu0 0.0
  %521 = vmatpush1.msra.mxu0 0.0
  %522 = vmatprep.subr.mxu0 0.0
  %523 = vmatpush1.msra.mxu0 0.0
  %524 = vmatprep.subr.mxu0 0.0
  %525 = vmatpush1.msra.mxu0 0.0
  %526 = vmatprep.subr.mxu0 0.0
  %527 = vmatpush1.msra.mxu0 0.0
  %528 = vmatprep.subr.mxu0 0.0
  %529 = vmatpush1.msra.mxu0 0.0
  %530 = vmatprep.subr.mxu0 0.0
  %531 = vmatpush1.msra.mxu0 0.0
  %532 = vmatprep.subr.mxu0 0.0
  %533 = vmatpush1.msra.mxu0 0.0
  %534 = vmatprep.subr.mxu0 0.0
  %535 = vmatpush1.msra.mxu0 0.0
  %536 = vmatprep.subr.mxu0 0.0
  %537 = vmatpush1.msra.mxu0 0.0
  %538 = vmatprep.subr.mxu0 0.0
  %539 = vmatpush1.msra.mxu0 0.0
  %540 = vmatprep.subr.mxu0 0.0
  %541 = vmatpush1.msra.mxu0 0.0
  %542 = vmatprep.subr.mxu0 0.0
  %543 = vmatpush1.msra.mxu0 0.0
  %544 = vmatprep.subr.mxu0 0.0
  %545 = vmatpush1.msra.mxu0 0.0
  %546 = vmatprep.subr.mxu0 0.0
  %547 = vmatpush1.msra.mxu0 0.0
  %548 = vmatprep.subr.mxu0 0.0
  %549 = vmatpush1.msra.mxu0 0.0
  %550 = vmatprep.subr.mxu0 0.0
  %551 = vmatpush1.msra.mxu0 0.0
  %552 = vmatprep.subr.mxu0 0.0
  %553 = vmatpush1.msra.mxu0 0.0
  %554 = vmatprep.subr.mxu0 0.0
  %555 = vmatpush1.msra.mxu0 0.0
  %556 = vmatprep.subr.mxu0 0.0
  %557 = vmatpush1.msra.mxu0 0.0
  %558 = vmatprep.mubr.f32.mxu0 0.0
  %v559 = vand.u32 %v126, 4294901760
  %v560 = vsub.f32 %v126, %v559
  %v561 = vand.u32 %v560, 4294901760
  %562 = vmatmul.mubr.f32.gmra.mrb[0].mxu0 %v561
  %v563 = vpop.f32.mrb[0].mxu0
  %v564 = vadd.f32 %v455, %v563
  %v565 = vpop.f32.mrb[0].mxu0
  %566 = vmatprep.mubr.f32.mxu0 0.0
  %v567 = vand.u32 %v129, 4294901760
  %v568 = vsub.f32 %v129, %v567
  %v569 = vand.u32 %v568, 4294901760
  %570 = vmatmul.mubr.f32.gmra.mrb[0].mxu0 %v569
  %v571 = vpop.f32.mrb[0].mxu0
  %v572 = vadd.f32 %v462, %v571
  %v573 = vpop.f32.mrb[0].mxu0
  %574 = vmatprep.mubr.f32.mxu0 0.0
  %v575 = vand.u32 %v132, 4294901760
  %v576 = vsub.f32 %v132, %v575
  %v577 = vand.u32 %v576, 4294901760
  %578 = vmatmul.mubr.f32.gmra.mrb[0].mxu0 %v577
  %v579 = vpop.f32.mrb[0].mxu0
  %v580 = vadd.f32 %v469, %v579
  %v581 = vpop.f32.mrb[0].mxu0
  %582 = vmatprep.mubr.f32.mxu0 0.0
  %v583 = vand.u32 %v135, 4294901760
  %v584 = vsub.f32 %v135, %v583
  %v585 = vand.u32 %v584, 4294901760
  %586 = vmatmul.mubr.f32.gmra.mrb[0].mxu0 %v585
  %v587 = vpop.f32.mrb[0].mxu0
  %v588 = vadd.f32 %v476, %v587
  %v589 = vpop.f32.mrb[0].mxu0
  %590 = vmatprep.mubr.f32.mxu0 0.0
  %v591 = vand.u32 %v138, 4294901760
  %v592 = vsub.f32 %v138, %v591
  %v593 = vand.u32 %v592, 4294901760
  %594 = vmatmul.mubr.f32.gmra.mrb[0].mxu0 %v593
  %v595 = vpop.f32.mrb[0].mxu0
  %v596 = vadd.f32 %v483, %v595
  %v597 = vpop.f32.mrb[0].mxu0
  %598 = vmatprep.mubr.f32.mxu0 0.0
  %v599 = vand.u32 %v141, 4294901760
  %v600 = vsub.f32 %v141, %v599
  %v601 = vand.u32 %v600, 4294901760
  %602 = vmatmul.mubr.f32.gmra.mrb[0].mxu0 %v601
  %v603 = vpop.f32.mrb[0].mxu0
  %v604 = vadd.f32 %v490, %v603
  %v605 = vpop.f32.mrb[0].mxu0
  %606 = vdwg.mxu0
  %607 = vmatprep.subr.mxu0 0.0
  %v608 = vsub.f32 %v31, %v31
  %v609 = vand.u32 %v608, 4294901760
  %610 = vmatpush1.msra.mxu0 %v609
  %611 = vmatprep.subr.mxu0 0.0
  %v612 = vand.u32 %v145, 4294901760
  %v613 = vsub.f32 %v145, %v612
  %v614 = vand.u32 %v613, 4294901760
  %615 = vmatpush1.msra.mxu0 %v614
  %616 = vmatprep.subr.mxu0 0.0
  %617 = vmatpush1.msra.mxu0 0.0
  %618 = vmatprep.subr.mxu0 0.0
  %619 = vmatpush1.msra.mxu0 0.0
  %620 = vmatprep.subr.mxu0 0.0
  %621 = vmatpush1.msra.mxu0 0.0
  %622 = vmatprep.subr.mxu0 0.0
  %623 = vmatpush1.msra.mxu0 0.0
  %624 = vmatprep.subr.mxu0 0.0
  %625 = vmatpush1.msra.mxu0 0.0
  %626 = vmatprep.subr.mxu0 0.0
  %627 = vmatpush1.msra.mxu0 0.0
  %628 = vmatprep.subr.mxu0 0.0
  %629 = vmatpush1.msra.mxu0 0.0
  %630 = vmatprep.subr.mxu0 0.0
  %631 = vmatpush1.msra.mxu0 0.0
  %632 = vmatprep.subr.mxu0 0.0
  %633 = vmatpush1.msra.mxu0 0.0
  %634 = vmatprep.subr.mxu0 0.0
  %635 = vmatpush1.msra.mxu0 0.0
  %636 = vmatprep.subr.mxu0 0.0
  %637 = vmatpush1.msra.mxu0 0.0
  %638 = vmatprep.subr.mxu0 0.0
  %639 = vmatpush1.msra.mxu0 0.0
  %640 = vmatprep.subr.mxu0 0.0
  %641 = vmatpush1.msra.mxu0 0.0
  %642 = vmatprep.subr.mxu0 0.0
  %643 = vmatpush1.msra.mxu0 0.0
  %644 = vmatprep.subr.mxu0 0.0
  %645 = vmatpush1.msra.mxu0 0.0
  %646 = vmatprep.subr.mxu0 0.0
  %647 = vmatpush1.msra.mxu0 0.0
  %648 = vmatprep.subr.mxu0 0.0
  %649 = vmatpush1.msra.mxu0 0.0
  %650 = vmatprep.subr.mxu0 0.0
  %651 = vmatpush1.msra.mxu0 0.0
  %652 = vmatprep.subr.mxu0 0.0
  %653 = vmatpush1.msra.mxu0 0.0
  %654 = vmatprep.subr.mxu0 0.0
  %655 = vmatpush1.msra.mxu0 0.0
  %656 = vmatprep.subr.mxu0 0.0
  %657 = vmatpush1.msra.mxu0 0.0
  %658 = vmatprep.subr.mxu0 0.0
  %659 = vmatpush1.msra.mxu0 0.0
  %660 = vmatprep.subr.mxu0 0.0
  %661 = vmatpush1.msra.mxu0 0.0
  %662 = vmatprep.subr.mxu0 0.0
  %663 = vmatpush1.msra.mxu0 0.0
  %664 = vmatprep.subr.mxu0 0.0
  %665 = vmatpush1.msra.mxu0 0.0
  %666 = vmatprep.subr.mxu0 0.0
  %667 = vmatpush1.msra.mxu0 0.0
  %668 = vmatprep.subr.mxu0 0.0
  %669 = vmatpush1.msra.mxu0 0.0
  %670 = vmatprep.subr.mxu0 0.0
  %671 = vmatpush1.msra.mxu0 0.0
  %672 = vmatprep.subr.mxu0 0.0
  %673 = vmatpush1.msra.mxu0 0.0
  %674 = vmatprep.subr.mxu0 0.0
  %675 = vmatpush1.msra.mxu0 0.0
  %676 = vmatprep.mubr.f32.mxu0 0.0
  %v677 = vand.u32 %v126, 4294901760
  %678 = vmatmul.mubr.f32.gmra.mrb[0].mxu0 %v677
  %v679 = vpop.f32.mrb[0].mxu0
  %v680 = vadd.f32 %v564, %v679
  %v681 = vpop.f32.mrb[0].mxu0
  %682 = vmatprep.mubr.f32.mxu0 0.0
  %v683 = vand.u32 %v129, 4294901760
  %684 = vmatmul.mubr.f32.gmra.mrb[0].mxu0 %v683
  %v685 = vpop.f32.mrb[0].mxu0
  %v686 = vadd.f32 %v572, %v685
  %v687 = vpop.f32.mrb[0].mxu0
  %688 = vmatprep.mubr.f32.mxu0 0.0
  %v689 = vand.u32 %v132, 4294901760
  %690 = vmatmul.mubr.f32.gmra.mrb[0].mxu0 %v689
  %v691 = vpop.f32.mrb[0].mxu0
  %v692 = vadd.f32 %v580, %v691
  %v693 = vpop.f32.mrb[0].mxu0
  %694 = vmatprep.mubr.f32.mxu0 0.0
  %v695 = vand.u32 %v135, 4294901760
  %696 = vmatmul.mubr.f32.gmra.mrb[0].mxu0 %v695
  %v697 = vpop.f32.mrb[0].mxu0
  %v698 = vadd.f32 %v588, %v697
  %v699 = vpop.f32.mrb[0].mxu0
  %700 = vmatprep.mubr.f32.mxu0 0.0
  %v701 = vand.u32 %v138, 4294901760
  %702 = vmatmul.mubr.f32.gmra.mrb[0].mxu0 %v701
  %v703 = vpop.f32.mrb[0].mxu0
  %v704 = vadd.f32 %v596, %v703
  %v705 = vpop.f32.mrb[0].mxu0
  %706 = vmatprep.mubr.f32.mxu0 0.0
  %v707 = vand.u32 %v141, 4294901760
  %708 = vmatmul.mubr.f32.gmra.mrb[0].mxu0 %v707
  %v709 = vpop.f32.mrb[0].mxu0
  %v710 = vadd.f32 %v604, %v709
  %v711 = vpop.f32.mrb[0].mxu0
  %712 = vdwg.mxu0
  %713 = vmatprep.subr.mxu0 0.0
  %714 = vmatpush1.msra.mxu0 %v31
  %715 = vmatprep.subr.mxu0 0.0
  %v716 = vand.u32 %v145, 4294901760
  %717 = vmatpush1.msra.mxu0 %v716
  %718 = vmatprep.subr.mxu0 0.0
  %719 = vmatpush1.msra.mxu0 0.0
  %720 = vmatprep.subr.mxu0 0.0
  %721 = vmatpush1.msra.mxu0 0.0
  %722 = vmatprep.subr.mxu0 0.0
  %723 = vmatpush1.msra.mxu0 0.0
  %724 = vmatprep.subr.mxu0 0.0
  %725 = vmatpush1.msra.mxu0 0.0
  %726 = vmatprep.subr.mxu0 0.0
  %727 = vmatpush1.msra.mxu0 0.0
  %728 = vmatprep.subr.mxu0 0.0
  %729 = vmatpush1.msra.mxu0 0.0
  %730 = vmatprep.subr.mxu0 0.0
  %731 = vmatpush1.msra.mxu0 0.0
  %732 = vmatprep.subr.mxu0 0.0
  %733 = vmatpush1.msra.mxu0 0.0
  %734 = vmatprep.subr.mxu0 0.0
  %735 = vmatpush1.msra.mxu0 0.0
  %736 = vmatprep.subr.mxu0 0.0
  %737 = vmatpush1.msra.mxu0 0.0
  %738 = vmatprep.subr.mxu0 0.0
  %739 = vmatpush1.msra.mxu0 0.0
  %740 = vmatprep.subr.mxu0 0.0
  %741 = vmatpush1.msra.mxu0 0.0
  %742 = vmatprep.subr.mxu0 0.0
  %743 = vmatpush1.msra.mxu0 0.0
  %744 = vmatprep.subr.mxu0 0.0
  %745 = vmatpush1.msra.mxu0 0.0
  %746 = vmatprep.subr.mxu0 0.0
  %747 = vmatpush1.msra.mxu0 0.0
  %748 = vmatprep.subr.mxu0 0.0
  %749 = vmatpush1.msra.mxu0 0.0
  %750 = vmatprep.subr.mxu0 0.0
  %751 = vmatpush1.msra.mxu0 0.0
  %752 = vmatprep.subr.mxu0 0.0
  %753 = vmatpush1.msra.mxu0 0.0
  %754 = vmatprep.subr.mxu0 0.0
  %755 = vmatpush1.msra.mxu0 0.0
  %756 = vmatprep.subr.mxu0 0.0
  %757 = vmatpush1.msra.mxu0 0.0
  %758 = vmatprep.subr.mxu0 0.0
  %759 = vmatpush1.msra.mxu0 0.0
  %760 = vmatprep.subr.mxu0 0.0
  %761 = vmatpush1.msra.mxu0 0.0
  %762 = vmatprep.subr.mxu0 0.0
  %763 = vmatpush1.msra.mxu0 0.0
  %764 = vmatprep.subr.mxu0 0.0
  %765 = vmatpush1.msra.mxu0 0.0
  %766 = vmatprep.subr.mxu0 0.0
  %767 = vmatpush1.msra.mxu0 0.0
  %768 = vmatprep.subr.mxu0 0.0
  %769 = vmatpush1.msra.mxu0 0.0
  %770 = vmatprep.subr.mxu0 0.0
  %771 = vmatpush1.msra.mxu0 0.0
  %772 = vmatprep.subr.mxu0 0.0
  %773 = vmatpush1.msra.mxu0 0.0
  %774 = vmatprep.subr.mxu0 0.0
  %775 = vmatpush1.msra.mxu0 0.0
  %776 = vmatprep.subr.mxu0 0.0
  %777 = vmatpush1.msra.mxu0 0.0
  %778 = vmatprep.mubr.f32.mxu0 0.0
  %v779 = vand.u32 %v126, 4294901760
  %780 = vmatmul.mubr.f32.gmra.mrb[0].mxu0 %v779
  %v781 = vpop.f32.mrb[0].mxu0
  %v782 = vadd.f32 %v680, %v781
  %v783 = vpop.f32.mrb[0].mxu0
  %784 = vmatprep.mubr.f32.mxu0 0.0
  %v785 = vand.u32 %v129, 4294901760
  %786 = vmatmul.mubr.f32.gmra.mrb[0].mxu0 %v785
  %v787 = vpop.f32.mrb[0].mxu0
  %v788 = vadd.f32 %v686, %v787
  %v789 = vpop.f32.mrb[0].mxu0
  %790 = vmatprep.mubr.f32.mxu0 0.0
  %v791 = vand.u32 %v132, 4294901760
  %792 = vmatmul.mubr.f32.gmra.mrb[0].mxu0 %v791
  %v793 = vpop.f32.mrb[0].mxu0
  %v794 = vadd.f32 %v692, %v793
  %v795 = vpop.f32.mrb[0].mxu0
  %796 = vmatprep.mubr.f32.mxu0 0.0
  %v797 = vand.u32 %v135, 4294901760
  %798 = vmatmul.mubr.f32.gmra.mrb[0].mxu0 %v797
  %v799 = vpop.f32.mrb[0].mxu0
  %v800 = vadd.f32 %v698, %v799
  %v801 = vpop.f32.mrb[0].mxu0
  %802 = vmatprep.mubr.f32.mxu0 0.0
  %v803 = vand.u32 %v138, 4294901760
  %804 = vmatmul.mubr.f32.gmra.mrb[0].mxu0 %v803
  %v805 = vpop.f32.mrb[0].mxu0
  %v806 = vadd.f32 %v704, %v805
  %v807 = vpop.f32.mrb[0].mxu0
  %808 = vmatprep.mubr.f32.mxu0 0.0
  %v809 = vand.u32 %v141, 4294901760
  %810 = vmatmul.mubr.f32.gmra.mrb[0].mxu0 %v809
  %v811 = vpop.f32.mrb[0].mxu0
  %v812 = vadd.f32 %v710, %v811
  %v813 = vpop.f32.mrb[0].mxu0
  %814 = vdwg.mxu0
  %vm815 = vcmask 392192
  %v817 = vsel %vm815, %v106, 0
  %v820 = vsel %vm815, %v107, 0
  %v823 = vsel %vm815, %v108, 0
  %v826 = vsel %vm815, %v109, 0
  %v829 = vsel %vm815, %v110, 0
  %v832 = vsel %vm815, %v111, 0
  %v835 = vsel %vm815, %v112, 0
  %v838 = vsel %vm815, %v113, 0
  %v841 = vsel %vm815, %v114, 0
  %v844 = vsel %vm815, %v115, 0
  %v847 = vsel %vm815, %v116, 0
  %v850 = vsel %vm815, %v117, 0
  %v853 = vsel %vm815, %v118, 0
  %v856 = vsel %vm815, %v119, 0
  %v859 = vsel %vm815, %v120, 0
  %v862 = vsel %vm815, %v121, 0
  %v865 = vsel %vm815, %v122, 0
  %v868 = vsel %vm815, %v123, 0
  %870 = vmatprep.subr.mxu0 0.0
  %v871 = vand.u32 %v782, 4294901760
  %872 = vmatpush1.msra.mxu0 %v871
  %873 = vmatprep.subr.mxu0 0.0
  %v874 = vand.u32 %v788, 4294901760
  %875 = vmatpush1.msra.mxu0 %v874
  %876 = vmatprep.subr.mxu0 0.0
  %v877 = vand.u32 %v794, 4294901760
  %878 = vmatpush1.msra.mxu0 %v877
  %879 = vmatprep.subr.mxu0 0.0
  %v880 = vand.u32 %v800, 4294901760
  %881 = vmatpush1.msra.mxu0 %v880
  %882 = vmatprep.subr.mxu0 0.0
  %v883 = vand.u32 %v806, 4294901760
  %884 = vmatpush1.msra.mxu0 %v883
  %885 = vmatprep.subr.mxu0 0.0
  %v886 = vand.u32 %v812, 4294901760
  %887 = vmatpush1.msra.mxu0 %v886
  %888 = vmatprep.subr.mxu0 0.0
  %889 = vmatpush1.msra.mxu0 0.0
  %890 = vmatprep.subr.mxu0 0.0
  %891 = vmatpush1.msra.mxu0 0.0
  %892 = vmatprep.subr.mxu0 0.0
  %893 = vmatpush1.msra.mxu0 0.0
  %894 = vmatprep.subr.mxu0 0.0
  %895 = vmatpush1.msra.mxu0 0.0
  %896 = vmatprep.subr.mxu0 0.0
  %897 = vmatpush1.msra.mxu0 0.0
  %898 = vmatprep.subr.mxu0 0.0
  %899 = vmatpush1.msra.mxu0 0.0
  %900 = vmatprep.subr.mxu0 0.0
  %901 = vmatpush1.msra.mxu0 0.0
  %902 = vmatprep.subr.mxu0 0.0
  %903 = vmatpush1.msra.mxu0 0.0
  %904 = vmatprep.subr.mxu0 0.0
  %905 = vmatpush1.msra.mxu0 0.0
  %906 = vmatprep.subr.mxu0 0.0
  %907 = vmatpush1.msra.mxu0 0.0
  %908 = vmatprep.subr.mxu0 0.0
  %909 = vmatpush1.msra.mxu0 0.0
  %910 = vmatprep.subr.mxu0 0.0
  %911 = vmatpush1.msra.mxu0 0.0
  %912 = vmatprep.subr.mxu0 0.0
  %913 = vmatpush1.msra.mxu0 0.0
  %914 = vmatprep.subr.mxu0 0.0
  %915 = vmatpush1.msra.mxu0 0.0
  %916 = vmatprep.subr.mxu0 0.0
  %917 = vmatpush1.msra.mxu0 0.0
  %918 = vmatprep.subr.mxu0 0.0
  %919 = vmatpush1.msra.mxu0 0.0
  %920 = vmatprep.subr.mxu0 0.0
  %921 = vmatpush1.msra.mxu0 0.0
  %922 = vmatprep.subr.mxu0 0.0
  %923 = vmatpush1.msra.mxu0 0.0
  %924 = vmatprep.subr.mxu0 0.0
  %925 = vmatpush1.msra.mxu0 0.0
  %926 = vmatprep.subr.mxu0 0.0
  %927 = vmatpush1.msra.mxu0 0.0
  %928 = vmatprep.subr.mxu0 0.0
  %929 = vmatpush1.msra.mxu0 0.0
  %930 = vmatprep.subr.mxu0 0.0
  %931 = vmatpush1.msra.mxu0 0.0
  %932 = vmatprep.subr.mxu0 0.0
  %933 = vmatpush1.msra.mxu0 0.0
  %934 = vmatprep.subr.mxu0 0.0
  %935 = vmatpush1.msra.mxu0 0.0
  %936 = vmatprep.subr.mxu0 0.0
  %937 = vmatpush1.msra.mxu0 0.0
  %938 = vmatprep.subr.mxu0 0.0
  %939 = vmatpush1.msra.mxu0 0.0
  %940 = vmatprep.mubr.f32.mxu0 0.0
  %v941 = vand.u32 %v817, 4294901760
  %v942 = vsub.f32 %v817, %v941
  %v943 = vand.u32 %v942, 4294901760
  %v944 = vsub.f32 %v942, %v943
  %v945 = vand.u32 %v944, 4294901760
  %946 = vmatmul.mubr.f32.gmra.mrb[0].mxu0 %v945
  %v947 = vpop.f32.mrb[0].mxu0
  %v948 = vadd.f32 0.0, %v947
  %v949 = vpop.f32.mrb[0].mxu0
  %950 = vmatprep.mubr.f32.mxu0 0.0
  %v951 = vand.u32 %v820, 4294901760
  %v952 = vsub.f32 %v820, %v951
  %v953 = vand.u32 %v952, 4294901760
  %v954 = vsub.f32 %v952, %v953
  %v955 = vand.u32 %v954, 4294901760
  %956 = vmatmul.mubr.f32.gmra.mrb[0].mxu0 %v955
  %v957 = vpop.f32.mrb[0].mxu0
  %v958 = vadd.f32 0.0, %v957
  %v959 = vpop.f32.mrb[0].mxu0
  %960 = vmatprep.mubr.f32.mxu0 0.0
  %v961 = vand.u32 %v823, 4294901760
  %v962 = vsub.f32 %v823, %v961
  %v963 = vand.u32 %v962, 4294901760
  %v964 = vsub.f32 %v962, %v963
  %v965 = vand.u32 %v964, 4294901760
  %966 = vmatmul.mubr.f32.gmra.mrb[0].mxu0 %v965
  %v967 = vpop.f32.mrb[0].mxu0
  %v968 = vadd.f32 0.0, %v967
  %v969 = vpop.f32.mrb[0].mxu0
  %970 = vmatprep.mubr.f32.mxu0 0.0
  %v971 = vand.u32 %v826, 4294901760
  %v972 = vsub.f32 %v826, %v971
  %v973 = vand.u32 %v972, 4294901760
  %v974 = vsub.f32 %v972, %v973
  %v975 = vand.u32 %v974, 4294901760
  %976 = vmatmul.mubr.f32.gmra.mrb[0].mxu0 %v975
  %v977 = vpop.f32.mrb[0].mxu0
  %v978 = vadd.f32 0.0, %v977
  %v979 = vpop.f32.mrb[0].mxu0
  %980 = vmatprep.mubr.f32.mxu0 0.0
  %v981 = vand.u32 %v829, 4294901760
  %v982 = vsub.f32 %v829, %v981
  %v983 = vand.u32 %v982, 4294901760
  %v984 = vsub.f32 %v982, %v983
  %v985 = vand.u32 %v984, 4294901760
  %986 = vmatmul.mubr.f32.gmra.mrb[0].mxu0 %v985
  %v987 = vpop.f32.mrb[0].mxu0
  %v988 = vadd.f32 0.0, %v987
  %v989 = vpop.f32.mrb[0].mxu0
  %990 = vmatprep.mubr.f32.mxu0 0.0
  %v991 = vand.u32 %v832, 4294901760
  %v992 = vsub.f32 %v832, %v991
  %v993 = vand.u32 %v992, 4294901760
  %v994 = vsub.f32 %v992, %v993
  %v995 = vand.u32 %v994, 4294901760
  %996 = vmatmul.mubr.f32.gmra.mrb[0].mxu0 %v995
  %v997 = vpop.f32.mrb[0].mxu0
  %v998 = vadd.f32 0.0, %v997
  %v999 = vpop.f32.mrb[0].mxu0
  %1000 = vmatprep.mubr.f32.mxu0 0.0
  %v1001 = vand.u32 %v835, 4294901760
  %v1002 = vsub.f32 %v835, %v1001
  %v1003 = vand.u32 %v1002, 4294901760
  %v1004 = vsub.f32 %v1002, %v1003
  %v1005 = vand.u32 %v1004, 4294901760
  %1006 = vmatmul.mubr.f32.gmra.mrb[0].mxu0 %v1005
  %v1007 = vpop.f32.mrb[0].mxu0
  %v1008 = vadd.f32 0.0, %v1007
  %v1009 = vpop.f32.mrb[0].mxu0
  %1010 = vmatprep.mubr.f32.mxu0 0.0
  %v1011 = vand.u32 %v838, 4294901760
  %v1012 = vsub.f32 %v838, %v1011
  %v1013 = vand.u32 %v1012, 4294901760
  %v1014 = vsub.f32 %v1012, %v1013
  %v1015 = vand.u32 %v1014, 4294901760
  %1016 = vmatmul.mubr.f32.gmra.mrb[0].mxu0 %v1015
  %v1017 = vpop.f32.mrb[0].mxu0
  %v1018 = vadd.f32 0.0, %v1017
  %v1019 = vpop.f32.mrb[0].mxu0
  %1020 = vmatprep.mubr.f32.mxu0 0.0
  %v1021 = vand.u32 %v841, 4294901760
  %v1022 = vsub.f32 %v841, %v1021
  %v1023 = vand.u32 %v1022, 4294901760
  %v1024 = vsub.f32 %v1022, %v1023
  %v1025 = vand.u32 %v1024, 4294901760
  %1026 = vmatmul.mubr.f32.gmra.mrb[0].mxu0 %v1025
  %v1027 = vpop.f32.mrb[0].mxu0
  %v1028 = vadd.f32 0.0, %v1027
  %v1029 = vpop.f32.mrb[0].mxu0
  %1030 = vmatprep.mubr.f32.mxu0 0.0
  %v1031 = vand.u32 %v844, 4294901760
  %v1032 = vsub.f32 %v844, %v1031
  %v1033 = vand.u32 %v1032, 4294901760
  %v1034 = vsub.f32 %v1032, %v1033
  %v1035 = vand.u32 %v1034, 4294901760
  %1036 = vmatmul.mubr.f32.gmra.mrb[0].mxu0 %v1035
  %v1037 = vpop.f32.mrb[0].mxu0
  %v1038 = vadd.f32 0.0, %v1037
  %v1039 = vpop.f32.mrb[0].mxu0
  %1040 = vmatprep.mubr.f32.mxu0 0.0
  %v1041 = vand.u32 %v847, 4294901760
  %v1042 = vsub.f32 %v847, %v1041
  %v1043 = vand.u32 %v1042, 4294901760
  %v1044 = vsub.f32 %v1042, %v1043
  %v1045 = vand.u32 %v1044, 4294901760
  %1046 = vmatmul.mubr.f32.gmra.mrb[0].mxu0 %v1045
  %v1047 = vpop.f32.mrb[0].mxu0
  %v1048 = vadd.f32 0.0, %v1047
  %v1049 = vpop.f32.mrb[0].mxu0
  %1050 = vmatprep.mubr.f32.mxu0 0.0
  %v1051 = vand.u32 %v850, 4294901760
  %v1052 = vsub.f32 %v850, %v1051
  %v1053 = vand.u32 %v1052, 4294901760
  %v1054 = vsub.f32 %v1052, %v1053
  %v1055 = vand.u32 %v1054, 4294901760
  %1056 = vmatmul.mubr.f32.gmra.mrb[0].mxu0 %v1055
  %v1057 = vpop.f32.mrb[0].mxu0
  %v1058 = vadd.f32 0.0, %v1057
  %v1059 = vpop.f32.mrb[0].mxu0
  %1060 = vmatprep.mubr.f32.mxu0 0.0
  %v1061 = vand.u32 %v853, 4294901760
  %v1062 = vsub.f32 %v853, %v1061
  %v1063 = vand.u32 %v1062, 4294901760
  %v1064 = vsub.f32 %v1062, %v1063
  %v1065 = vand.u32 %v1064, 4294901760
  %1066 = vmatmul.mubr.f32.gmra.mrb[0].mxu0 %v1065
  %v1067 = vpop.f32.mrb[0].mxu0
  %v1068 = vadd.f32 0.0, %v1067
  %v1069 = vpop.f32.mrb[0].mxu0
  %1070 = vmatprep.mubr.f32.mxu0 0.0
  %v1071 = vand.u32 %v856, 4294901760
  %v1072 = vsub.f32 %v856, %v1071
  %v1073 = vand.u32 %v1072, 4294901760
  %v1074 = vsub.f32 %v1072, %v1073
  %v1075 = vand.u32 %v1074, 4294901760
  %1076 = vmatmul.mubr.f32.gmra.mrb[0].mxu0 %v1075
  %v1077 = vpop.f32.mrb[0].mxu0
  %v1078 = vadd.f32 0.0, %v1077
  %v1079 = vpop.f32.mrb[0].mxu0
  %1080 = vmatprep.mubr.f32.mxu0 0.0
  %v1081 = vand.u32 %v859, 4294901760
  %v1082 = vsub.f32 %v859, %v1081
  %v1083 = vand.u32 %v1082, 4294901760
  %v1084 = vsub.f32 %v1082, %v1083
  %v1085 = vand.u32 %v1084, 4294901760
  %1086 = vmatmul.mubr.f32.gmra.mrb[0].mxu0 %v1085
  %v1087 = vpop.f32.mrb[0].mxu0
  %v1088 = vadd.f32 0.0, %v1087
  %v1089 = vpop.f32.mrb[0].mxu0
  %1090 = vmatprep.mubr.f32.mxu0 0.0
  %v1091 = vand.u32 %v862, 4294901760
  %v1092 = vsub.f32 %v862, %v1091
  %v1093 = vand.u32 %v1092, 4294901760
  %v1094 = vsub.f32 %v1092, %v1093
  %v1095 = vand.u32 %v1094, 4294901760
  %1096 = vmatmul.mubr.f32.gmra.mrb[0].mxu0 %v1095
  %v1097 = vpop.f32.mrb[0].mxu0
  %v1098 = vadd.f32 0.0, %v1097
  %v1099 = vpop.f32.mrb[0].mxu0
  %1100 = vmatprep.mubr.f32.mxu0 0.0
  %v1101 = vand.u32 %v865, 4294901760
  %v1102 = vsub.f32 %v865, %v1101
  %v1103 = vand.u32 %v1102, 4294901760
  %v1104 = vsub.f32 %v1102, %v1103
  %v1105 = vand.u32 %v1104, 4294901760
  %1106 = vmatmul.mubr.f32.gmra.mrb[0].mxu0 %v1105
  %v1107 = vpop.f32.mrb[0].mxu0
  %v1108 = vadd.f32 0.0, %v1107
  %v1109 = vpop.f32.mrb[0].mxu0
  %1110 = vmatprep.mubr.f32.mxu0 0.0
  %v1111 = vand.u32 %v868, 4294901760
  %v1112 = vsub.f32 %v868, %v1111
  %v1113 = vand.u32 %v1112, 4294901760
  %v1114 = vsub.f32 %v1112, %v1113
  %v1115 = vand.u32 %v1114, 4294901760
  %1116 = vmatmul.mubr.f32.gmra.mrb[0].mxu0 %v1115
  %v1117 = vpop.f32.mrb[0].mxu0
  %v1118 = vadd.f32 0.0, %v1117
  %v1119 = vpop.f32.mrb[0].mxu0
  %1120 = vdwg.mxu0
  %1121 = vmatprep.subr.mxu0 0.0
  %v1122 = vand.u32 %v782, 4294901760
  %v1123 = vsub.f32 %v782, %v1122
  %v1124 = vand.u32 %v1123, 4294901760
  %v1125 = vsub.f32 %v1123, %v1124
  %v1126 = vand.u32 %v1125, 4294901760
  %1127 = vmatpush1.msra.mxu0 %v1126
  %1128 = vmatprep.subr.mxu0 0.0
  %v1129 = vand.u32 %v788, 4294901760
  %v1130 = vsub.f32 %v788, %v1129
  %v1131 = vand.u32 %v1130, 4294901760
  %v1132 = vsub.f32 %v1130, %v1131
  %v1133 = vand.u32 %v1132, 4294901760
  %1134 = vmatpush1.msra.mxu0 %v1133
  %1135 = vmatprep.subr.mxu0 0.0
  %v1136 = vand.u32 %v794, 4294901760
  %v1137 = vsub.f32 %v794, %v1136
  %v1138 = vand.u32 %v1137, 4294901760
  %v1139 = vsub.f32 %v1137, %v1138
  %v1140 = vand.u32 %v1139, 4294901760
  %1141 = vmatpush1.msra.mxu0 %v1140
  %1142 = vmatprep.subr.mxu0 0.0
  %v1143 = vand.u32 %v800, 4294901760
  %v1144 = vsub.f32 %v800, %v1143
  %v1145 = vand.u32 %v1144, 4294901760
  %v1146 = vsub.f32 %v1144, %v1145
  %v1147 = vand.u32 %v1146, 4294901760
  %1148 = vmatpush1.msra.mxu0 %v1147
  %1149 = vmatprep.subr.mxu0 0.0
  %v1150 = vand.u32 %v806, 4294901760
  %v1151 = vsub.f32 %v806, %v1150
  %v1152 = vand.u32 %v1151, 4294901760
  %v1153 = vsub.f32 %v1151, %v1152
  %v1154 = vand.u32 %v1153, 4294901760
  %1155 = vmatpush1.msra.mxu0 %v1154
  %1156 = vmatprep.subr.mxu0 0.0
  %v1157 = vand.u32 %v812, 4294901760
  %v1158 = vsub.f32 %v812, %v1157
  %v1159 = vand.u32 %v1158, 4294901760
  %v1160 = vsub.f32 %v1158, %v1159
  %v1161 = vand.u32 %v1160, 4294901760
  %1162 = vmatpush1.msra.mxu0 %v1161
  %1163 = vmatprep.subr.mxu0 0.0
  %1164 = vmatpush1.msra.mxu0 0.0
  %1165 = vmatprep.subr.mxu0 0.0
  %1166 = vmatpush1.msra.mxu0 0.0
  %1167 = vmatprep.subr.mxu0 0.0
  %1168 = vmatpush1.msra.mxu0 0.0
  %1169 = vmatprep.subr.mxu0 0.0
  %1170 = vmatpush1.msra.mxu0 0.0
  %1171 = vmatprep.subr.mxu0 0.0
  %1172 = vmatpush1.msra.mxu0 0.0
  %1173 = vmatprep.subr.mxu0 0.0
  %1174 = vmatpush1.msra.mxu0 0.0
  %1175 = vmatprep.subr.mxu0 0.0
  %1176 = vmatpush1.msra.mxu0 0.0
  %1177 = vmatprep.subr.mxu0 0.0
  %1178 = vmatpush1.msra.mxu0 0.0
  %1179 = vmatprep.subr.mxu0 0.0
  %1180 = vmatpush1.msra.mxu0 0.0
  %1181 = vmatprep.subr.mxu0 0.0
  %1182 = vmatpush1.msra.mxu0 0.0
  %1183 = vmatprep.subr.mxu0 0.0
  %1184 = vmatpush1.msra.mxu0 0.0
  %1185 = vmatprep.subr.mxu0 0.0
  %1186 = vmatpush1.msra.mxu0 0.0
  %1187 = vmatprep.subr.mxu0 0.0
  %1188 = vmatpush1.msra.mxu0 0.0
  %1189 = vmatprep.subr.mxu0 0.0
  %1190 = vmatpush1.msra.mxu0 0.0
  %1191 = vmatprep.subr.mxu0 0.0
  %1192 = vmatpush1.msra.mxu0 0.0
  %1193 = vmatprep.subr.mxu0 0.0
  %1194 = vmatpush1.msra.mxu0 0.0
  %1195 = vmatprep.subr.mxu0 0.0
  %1196 = vmatpush1.msra.mxu0 0.0
  %1197 = vmatprep.subr.mxu0 0.0
  %1198 = vmatpush1.msra.mxu0 0.0
  %1199 = vmatprep.subr.mxu0 0.0
  %1200 = vmatpush1.msra.mxu0 0.0
  %1201 = vmatprep.subr.mxu0 0.0
  %1202 = vmatpush1.msra.mxu0 0.0
  %1203 = vmatprep.subr.mxu0 0.0
  %1204 = vmatpush1.msra.mxu0 0.0
  %1205 = vmatprep.subr.mxu0 0.0
  %1206 = vmatpush1.msra.mxu0 0.0
  %1207 = vmatprep.subr.mxu0 0.0
  %1208 = vmatpush1.msra.mxu0 0.0
  %1209 = vmatprep.subr.mxu0 0.0
  %1210 = vmatpush1.msra.mxu0 0.0
  %1211 = vmatprep.subr.mxu0 0.0
  %1212 = vmatpush1.msra.mxu0 0.0
  %1213 = vmatprep.subr.mxu0 0.0
  %1214 = vmatpush1.msra.mxu0 0.0
  %1215 = vmatprep.mubr.f32.mxu0 0.0
  %v1216 = vand.u32 %v817, 4294901760
  %1217 = vmatmul.mubr.f32.gmra.mrb[0].mxu0 %v1216
  %v1218 = vpop.f32.mrb[0].mxu0
  %v1219 = vadd.f32 %v948, %v1218
  %v1220 = vpop.f32.mrb[0].mxu0
  %1221 = vmatprep.mubr.f32.mxu0 0.0
  %v1222 = vand.u32 %v820, 4294901760
  %1223 = vmatmul.mubr.f32.gmra.mrb[0].mxu0 %v1222
  %v1224 = vpop.f32.mrb[0].mxu0
  %v1225 = vadd.f32 %v958, %v1224
  %v1226 = vpop.f32.mrb[0].mxu0
  %1227 = vmatprep.mubr.f32.mxu0 0.0
  %v1228 = vand.u32 %v823, 4294901760
  %1229 = vmatmul.mubr.f32.gmra.mrb[0].mxu0 %v1228
  %v1230 = vpop.f32.mrb[0].mxu0
  %v1231 = vadd.f32 %v968, %v1230
  %v1232 = vpop.f32.mrb[0].mxu0
  %1233 = vmatprep.mubr.f32.mxu0 0.0
  %v1234 = vand.u32 %v826, 4294901760
  %1235 = vmatmul.mubr.f32.gmra.mrb[0].mxu0 %v1234
  %v1236 = vpop.f32.mrb[0].mxu0
  %v1237 = vadd.f32 %v978, %v1236
  %v1238 = vpop.f32.mrb[0].mxu0
  %1239 = vmatprep.mubr.f32.mxu0 0.0
  %v1240 = vand.u32 %v829, 4294901760
  %1241 = vmatmul.mubr.f32.gmra.mrb[0].mxu0 %v1240
  %v1242 = vpop.f32.mrb[0].mxu0
  %v1243 = vadd.f32 %v988, %v1242
  %v1244 = vpop.f32.mrb[0].mxu0
  %1245 = vmatprep.mubr.f32.mxu0 0.0
  %v1246 = vand.u32 %v832, 4294901760
  %1247 = vmatmul.mubr.f32.gmra.mrb[0].mxu0 %v1246
  %v1248 = vpop.f32.mrb[0].mxu0
  %v1249 = vadd.f32 %v998, %v1248
  %v1250 = vpop.f32.mrb[0].mxu0
  %1251 = vmatprep.mubr.f32.mxu0 0.0
  %v1252 = vand.u32 %v835, 4294901760
  %1253 = vmatmul.mubr.f32.gmra.mrb[0].mxu0 %v1252
  %v1254 = vpop.f32.mrb[0].mxu0
  %v1255 = vadd.f32 %v1008, %v1254
  %v1256 = vpop.f32.mrb[0].mxu0
  %1257 = vmatprep.mubr.f32.mxu0 0.0
  %v1258 = vand.u32 %v838, 4294901760
  %1259 = vmatmul.mubr.f32.gmra.mrb[0].mxu0 %v1258
  %v1260 = vpop.f32.mrb[0].mxu0
  %v1261 = vadd.f32 %v1018, %v1260
  %v1262 = vpop.f32.mrb[0].mxu0
  %1263 = vmatprep.mubr.f32.mxu0 0.0
  %v1264 = vand.u32 %v841, 4294901760
  %1265 = vmatmul.mubr.f32.gmra.mrb[0].mxu0 %v1264
  %v1266 = vpop.f32.mrb[0].mxu0
  %v1267 = vadd.f32 %v1028, %v1266
  %v1268 = vpop.f32.mrb[0].mxu0
  %1269 = vmatprep.mubr.f32.mxu0 0.0
  %v1270 = vand.u32 %v844, 4294901760
  %1271 = vmatmul.mubr.f32.gmra.mrb[0].mxu0 %v1270
  %v1272 = vpop.f32.mrb[0].mxu0
  %v1273 = vadd.f32 %v1038, %v1272
  %v1274 = vpop.f32.mrb[0].mxu0
  %1275 = vmatprep.mubr.f32.mxu0 0.0
  %v1276 = vand.u32 %v847, 4294901760
  %1277 = vmatmul.mubr.f32.gmra.mrb[0].mxu0 %v1276
  %v1278 = vpop.f32.mrb[0].mxu0
  %v1279 = vadd.f32 %v1048, %v1278
  %v1280 = vpop.f32.mrb[0].mxu0
  %1281 = vmatprep.mubr.f32.mxu0 0.0
  %v1282 = vand.u32 %v850, 4294901760
  %1283 = vmatmul.mubr.f32.gmra.mrb[0].mxu0 %v1282
  %v1284 = vpop.f32.mrb[0].mxu0
  %v1285 = vadd.f32 %v1058, %v1284
  %v1286 = vpop.f32.mrb[0].mxu0
  %1287 = vmatprep.mubr.f32.mxu0 0.0
  %v1288 = vand.u32 %v853, 4294901760
  %1289 = vmatmul.mubr.f32.gmra.mrb[0].mxu0 %v1288
  %v1290 = vpop.f32.mrb[0].mxu0
  %v1291 = vadd.f32 %v1068, %v1290
  %v1292 = vpop.f32.mrb[0].mxu0
  %1293 = vmatprep.mubr.f32.mxu0 0.0
  %v1294 = vand.u32 %v856, 4294901760
  %1295 = vmatmul.mubr.f32.gmra.mrb[0].mxu0 %v1294
  %v1296 = vpop.f32.mrb[0].mxu0
  %v1297 = vadd.f32 %v1078, %v1296
  %v1298 = vpop.f32.mrb[0].mxu0
  %1299 = vmatprep.mubr.f32.mxu0 0.0
  %v1300 = vand.u32 %v859, 4294901760
  %1301 = vmatmul.mubr.f32.gmra.mrb[0].mxu0 %v1300
  %v1302 = vpop.f32.mrb[0].mxu0
  %v1303 = vadd.f32 %v1088, %v1302
  %v1304 = vpop.f32.mrb[0].mxu0
  %1305 = vmatprep.mubr.f32.mxu0 0.0
  %v1306 = vand.u32 %v862, 4294901760
  %1307 = vmatmul.mubr.f32.gmra.mrb[0].mxu0 %v1306
  %v1308 = vpop.f32.mrb[0].mxu0
  %v1309 = vadd.f32 %v1098, %v1308
  %v1310 = vpop.f32.mrb[0].mxu0
  %1311 = vmatprep.mubr.f32.mxu0 0.0
  %v1312 = vand.u32 %v865, 4294901760
  %1313 = vmatmul.mubr.f32.gmra.mrb[0].mxu0 %v1312
  %v1314 = vpop.f32.mrb[0].mxu0
  %v1315 = vadd.f32 %v1108, %v1314
  %v1316 = vpop.f32.mrb[0].mxu0
  %1317 = vmatprep.mubr.f32.mxu0 0.0
  %v1318 = vand.u32 %v868, 4294901760
  %1319 = vmatmul.mubr.f32.gmra.mrb[0].mxu0 %v1318
  %v1320 = vpop.f32.mrb[0].mxu0
  %v1321 = vadd.f32 %v1118, %v1320
  %v1322 = vpop.f32.mrb[0].mxu0
  %1323 = vdwg.mxu0
  %1324 = vmatprep.subr.mxu0 0.0
  %v1325 = vand.u32 %v782, 4294901760
  %v1326 = vsub.f32 %v782, %v1325
  %1327 = vmatpush1.msra.mxu0 %v1326
  %1328 = vmatprep.subr.mxu0 0.0
  %v1329 = vand.u32 %v788, 4294901760
  %v1330 = vsub.f32 %v788, %v1329
  %1331 = vmatpush1.msra.mxu0 %v1330
  %1332 = vmatprep.subr.mxu0 0.0
  %v1333 = vand.u32 %v794, 4294901760
  %v1334 = vsub.f32 %v794, %v1333
  %1335 = vmatpush1.msra.mxu0 %v1334
  %1336 = vmatprep.subr.mxu0 0.0
  %v1337 = vand.u32 %v800, 4294901760
  %v1338 = vsub.f32 %v800, %v1337
  %1339 = vmatpush1.msra.mxu0 %v1338
  %1340 = vmatprep.subr.mxu0 0.0
  %v1341 = vand.u32 %v806, 4294901760
  %v1342 = vsub.f32 %v806, %v1341
  %1343 = vmatpush1.msra.mxu0 %v1342
  %1344 = vmatprep.subr.mxu0 0.0
  %v1345 = vand.u32 %v812, 4294901760
  %v1346 = vsub.f32 %v812, %v1345
  %1347 = vmatpush1.msra.mxu0 %v1346
  %1348 = vmatprep.subr.mxu0 0.0
  %1349 = vmatpush1.msra.mxu0 0.0
  %1350 = vmatprep.subr.mxu0 0.0
  %1351 = vmatpush1.msra.mxu0 0.0
  %1352 = vmatprep.subr.mxu0 0.0
  %1353 = vmatpush1.msra.mxu0 0.0
  %1354 = vmatprep.subr.mxu0 0.0
  %1355 = vmatpush1.msra.mxu0 0.0
  %1356 = vmatprep.subr.mxu0 0.0
  %1357 = vmatpush1.msra.mxu0 0.0
  %1358 = vmatprep.subr.mxu0 0.0
  %1359 = vmatpush1.msra.mxu0 0.0
  %1360 = vmatprep.subr.mxu0 0.0
  %1361 = vmatpush1.msra.mxu0 0.0
  %1362 = vmatprep.subr.mxu0 0.0
  %1363 = vmatpush1.msra.mxu0 0.0
  %1364 = vmatprep.subr.mxu0 0.0
  %1365 = vmatpush1.msra.mxu0 0.0
  %1366 = vmatprep.subr.mxu0 0.0
  %1367 = vmatpush1.msra.mxu0 0.0
  %1368 = vmatprep.subr.mxu0 0.0
  %1369 = vmatpush1.msra.mxu0 0.0
  %1370 = vmatprep.subr.mxu0 0.0
  %1371 = vmatpush1.msra.mxu0 0.0
  %1372 = vmatprep.subr.mxu0 0.0
  %1373 = vmatpush1.msra.mxu0 0.0
  %1374 = vmatprep.subr.mxu0 0.0
  %1375 = vmatpush1.msra.mxu0 0.0
  %1376 = vmatprep.subr.mxu0 0.0
  %1377 = vmatpush1.msra.mxu0 0.0
  %1378 = vmatprep.subr.mxu0 0.0
  %1379 = vmatpush1.msra.mxu0 0.0
  %1380 = vmatprep.subr.mxu0 0.0
  %1381 = vmatpush1.msra.mxu0 0.0
  %1382 = vmatprep.subr.mxu0 0.0
  %1383 = vmatpush1.msra.mxu0 0.0
  %1384 = vmatprep.subr.mxu0 0.0
  %1385 = vmatpush1.msra.mxu0 0.0
  %1386 = vmatprep.subr.mxu0 0.0
  %1387 = vmatpush1.msra.mxu0 0.0
  %1388 = vmatprep.subr.mxu0 0.0
  %1389 = vmatpush1.msra.mxu0 0.0
  %1390 = vmatprep.subr.mxu0 0.0
  %1391 = vmatpush1.msra.mxu0 0.0
  %1392 = vmatprep.subr.mxu0 0.0
  %1393 = vmatpush1.msra.mxu0 0.0
  %1394 = vmatprep.subr.mxu0 0.0
  %1395 = vmatpush1.msra.mxu0 0.0
  %1396 = vmatprep.subr.mxu0 0.0
  %1397 = vmatpush1.msra.mxu0 0.0
  %1398 = vmatprep.subr.mxu0 0.0
  %1399 = vmatpush1.msra.mxu0 0.0
  %1400 = vmatprep.mubr.f32.mxu0 0.0
  %v1401 = vand.u32 %v817, 4294901760
  %v1402 = vsub.f32 %v817, %v1401
  %1403 = vmatmul.mubr.f32.gmra.mrb[0].mxu0 %v1402
  %v1404 = vpop.f32.mrb[0].mxu0
  %v1405 = vadd.f32 %v1219, %v1404
  %v1406 = vpop.f32.mrb[0].mxu0
  %1407 = vmatprep.mubr.f32.mxu0 0.0
  %v1408 = vand.u32 %v820, 4294901760
  %v1409 = vsub.f32 %v820, %v1408
  %1410 = vmatmul.mubr.f32.gmra.mrb[0].mxu0 %v1409
  %v1411 = vpop.f32.mrb[0].mxu0
  %v1412 = vadd.f32 %v1225, %v1411
  %v1413 = vpop.f32.mrb[0].mxu0
  %1414 = vmatprep.mubr.f32.mxu0 0.0
  %v1415 = vand.u32 %v823, 4294901760
  %v1416 = vsub.f32 %v823, %v1415
  %1417 = vmatmul.mubr.f32.gmra.mrb[0].mxu0 %v1416
  %v1418 = vpop.f32.mrb[0].mxu0
  %v1419 = vadd.f32 %v1231, %v1418
  %v1420 = vpop.f32.mrb[0].mxu0
  %1421 = vmatprep.mubr.f32.mxu0 0.0
  %v1422 = vand.u32 %v826, 4294901760
  %v1423 = vsub.f32 %v826, %v1422
  %1424 = vmatmul.mubr.f32.gmra.mrb[0].mxu0 %v1423
  %v1425 = vpop.f32.mrb[0].mxu0
  %v1426 = vadd.f32 %v1237, %v1425
  %v1427 = vpop.f32.mrb[0].mxu0
  %1428 = vmatprep.mubr.f32.mxu0 0.0
  %v1429 = vand.u32 %v829, 4294901760
  %v1430 = vsub.f32 %v829, %v1429
  %1431 = vmatmul.mubr.f32.gmra.mrb[0].mxu0 %v1430
  %v1432 = vpop.f32.mrb[0].mxu0
  %v1433 = vadd.f32 %v1243, %v1432
  %v1434 = vpop.f32.mrb[0].mxu0
  %1435 = vmatprep.mubr.f32.mxu0 0.0
  %v1436 = vand.u32 %v832, 4294901760
  %v1437 = vsub.f32 %v832, %v1436
  %1438 = vmatmul.mubr.f32.gmra.mrb[0].mxu0 %v1437
  %v1439 = vpop.f32.mrb[0].mxu0
  %v1440 = vadd.f32 %v1249, %v1439
  %v1441 = vpop.f32.mrb[0].mxu0
  %1442 = vmatprep.mubr.f32.mxu0 0.0
  %v1443 = vand.u32 %v835, 4294901760
  %v1444 = vsub.f32 %v835, %v1443
  %1445 = vmatmul.mubr.f32.gmra.mrb[0].mxu0 %v1444
  %v1446 = vpop.f32.mrb[0].mxu0
  %v1447 = vadd.f32 %v1255, %v1446
  %v1448 = vpop.f32.mrb[0].mxu0
  %1449 = vmatprep.mubr.f32.mxu0 0.0
  %v1450 = vand.u32 %v838, 4294901760
  %v1451 = vsub.f32 %v838, %v1450
  %1452 = vmatmul.mubr.f32.gmra.mrb[0].mxu0 %v1451
  %v1453 = vpop.f32.mrb[0].mxu0
  %v1454 = vadd.f32 %v1261, %v1453
  %v1455 = vpop.f32.mrb[0].mxu0
  %1456 = vmatprep.mubr.f32.mxu0 0.0
  %v1457 = vand.u32 %v841, 4294901760
  %v1458 = vsub.f32 %v841, %v1457
  %1459 = vmatmul.mubr.f32.gmra.mrb[0].mxu0 %v1458
  %v1460 = vpop.f32.mrb[0].mxu0
  %v1461 = vadd.f32 %v1267, %v1460
  %v1462 = vpop.f32.mrb[0].mxu0
  %1463 = vmatprep.mubr.f32.mxu0 0.0
  %v1464 = vand.u32 %v844, 4294901760
  %v1465 = vsub.f32 %v844, %v1464
  %1466 = vmatmul.mubr.f32.gmra.mrb[0].mxu0 %v1465
  %v1467 = vpop.f32.mrb[0].mxu0
  %v1468 = vadd.f32 %v1273, %v1467
  %v1469 = vpop.f32.mrb[0].mxu0
  %1470 = vmatprep.mubr.f32.mxu0 0.0
  %v1471 = vand.u32 %v847, 4294901760
  %v1472 = vsub.f32 %v847, %v1471
  %1473 = vmatmul.mubr.f32.gmra.mrb[0].mxu0 %v1472
  %v1474 = vpop.f32.mrb[0].mxu0
  %v1475 = vadd.f32 %v1279, %v1474
  %v1476 = vpop.f32.mrb[0].mxu0
  %1477 = vmatprep.mubr.f32.mxu0 0.0
  %v1478 = vand.u32 %v850, 4294901760
  %v1479 = vsub.f32 %v850, %v1478
  %1480 = vmatmul.mubr.f32.gmra.mrb[0].mxu0 %v1479
  %v1481 = vpop.f32.mrb[0].mxu0
  %v1482 = vadd.f32 %v1285, %v1481
  %v1483 = vpop.f32.mrb[0].mxu0
  %1484 = vmatprep.mubr.f32.mxu0 0.0
  %v1485 = vand.u32 %v853, 4294901760
  %v1486 = vsub.f32 %v853, %v1485
  %1487 = vmatmul.mubr.f32.gmra.mrb[0].mxu0 %v1486
  %v1488 = vpop.f32.mrb[0].mxu0
  %v1489 = vadd.f32 %v1291, %v1488
  %v1490 = vpop.f32.mrb[0].mxu0
  %1491 = vmatprep.mubr.f32.mxu0 0.0
  %v1492 = vand.u32 %v856, 4294901760
  %v1493 = vsub.f32 %v856, %v1492
  %1494 = vmatmul.mubr.f32.gmra.mrb[0].mxu0 %v1493
  %v1495 = vpop.f32.mrb[0].mxu0
  %v1496 = vadd.f32 %v1297, %v1495
  %v1497 = vpop.f32.mrb[0].mxu0
  %1498 = vmatprep.mubr.f32.mxu0 0.0
  %v1499 = vand.u32 %v859, 4294901760
  %v1500 = vsub.f32 %v859, %v1499
  %1501 = vmatmul.mubr.f32.gmra.mrb[0].mxu0 %v1500
  %v1502 = vpop.f32.mrb[0].mxu0
  %v1503 = vadd.f32 %v1303, %v1502
  %v1504 = vpop.f32.mrb[0].mxu0
  %1505 = vmatprep.mubr.f32.mxu0 0.0
  %v1506 = vand.u32 %v862, 4294901760
  %v1507 = vsub.f32 %v862, %v1506
  %1508 = vmatmul.mubr.f32.gmra.mrb[0].mxu0 %v1507
  %v1509 = vpop.f32.mrb[0].mxu0
  %v1510 = vadd.f32 %v1309, %v1509
  %v1511 = vpop.f32.mrb[0].mxu0
  %1512 = vmatprep.mubr.f32.mxu0 0.0
  %v1513 = vand.u32 %v865, 4294901760
  %v1514 = vsub.f32 %v865, %v1513
  %1515 = vmatmul.mubr.f32.gmra.mrb[0].mxu0 %v1514
  %v1516 = vpop.f32.mrb[0].mxu0
  %v1517 = vadd.f32 %v1315, %v1516
  %v1518 = vpop.f32.mrb[0].mxu0
  %1519 = vmatprep.mubr.f32.mxu0 0.0
  %v1520 = vand.u32 %v868, 4294901760
  %v1521 = vsub.f32 %v868, %v1520
  %1522 = vmatmul.mubr.f32.gmra.mrb[0].mxu0 %v1521
  %v1523 = vpop.f32.mrb[0].mxu0
  %v1524 = vadd.f32 %v1321, %v1523
  %v1525 = vpop.f32.mrb[0].mxu0
  %1526 = vdwg.mxu0
  %1527 = vmatprep.subr.mxu0 0.0
  %v1528 = vand.u32 %v782, 4294901760
  %1529 = vmatpush1.msra.mxu0 %v1528
  %1530 = vmatprep.subr.mxu0 0.0
  %v1531 = vand.u32 %v788, 4294901760
  %1532 = vmatpush1.msra.mxu0 %v1531
  %1533 = vmatprep.subr.mxu0 0.0
  %v1534 = vand.u32 %v794, 4294901760
  %1535 = vmatpush1.msra.mxu0 %v1534
  %1536 = vmatprep.subr.mxu0 0.0
  %v1537 = vand.u32 %v800, 4294901760
  %1538 = vmatpush1.msra.mxu0 %v1537
  %1539 = vmatprep.subr.mxu0 0.0
  %v1540 = vand.u32 %v806, 4294901760
  %1541 = vmatpush1.msra.mxu0 %v1540
  %1542 = vmatprep.subr.mxu0 0.0
  %v1543 = vand.u32 %v812, 4294901760
  %1544 = vmatpush1.msra.mxu0 %v1543
  %1545 = vmatprep.subr.mxu0 0.0
  %1546 = vmatpush1.msra.mxu0 0.0
  %1547 = vmatprep.subr.mxu0 0.0
  %1548 = vmatpush1.msra.mxu0 0.0
  %1549 = vmatprep.subr.mxu0 0.0
  %1550 = vmatpush1.msra.mxu0 0.0
  %1551 = vmatprep.subr.mxu0 0.0
  %1552 = vmatpush1.msra.mxu0 0.0
  %1553 = vmatprep.subr.mxu0 0.0
  %1554 = vmatpush1.msra.mxu0 0.0
  %1555 = vmatprep.subr.mxu0 0.0
  %1556 = vmatpush1.msra.mxu0 0.0
  %1557 = vmatprep.subr.mxu0 0.0
  %1558 = vmatpush1.msra.mxu0 0.0
  %1559 = vmatprep.subr.mxu0 0.0
  %1560 = vmatpush1.msra.mxu0 0.0
  %1561 = vmatprep.subr.mxu0 0.0
  %1562 = vmatpush1.msra.mxu0 0.0
  %1563 = vmatprep.subr.mxu0 0.0
  %1564 = vmatpush1.msra.mxu0 0.0
  %1565 = vmatprep.subr.mxu0 0.0
  %1566 = vmatpush1.msra.mxu0 0.0
  %1567 = vmatprep.subr.mxu0 0.0
  %1568 = vmatpush1.msra.mxu0 0.0
  %1569 = vmatprep.subr.mxu0 0.0
  %1570 = vmatpush1.msra.mxu0 0.0
  %1571 = vmatprep.subr.mxu0 0.0
  %1572 = vmatpush1.msra.mxu0 0.0
  %1573 = vmatprep.subr.mxu0 0.0
  %1574 = vmatpush1.msra.mxu0 0.0
  %1575 = vmatprep.subr.mxu0 0.0
  %1576 = vmatpush1.msra.mxu0 0.0
  %1577 = vmatprep.subr.mxu0 0.0
  %1578 = vmatpush1.msra.mxu0 0.0
  %1579 = vmatprep.subr.mxu0 0.0
  %1580 = vmatpush1.msra.mxu0 0.0
  %1581 = vmatprep.subr.mxu0 0.0
  %1582 = vmatpush1.msra.mxu0 0.0
  %1583 = vmatprep.subr.mxu0 0.0
  %1584 = vmatpush1.msra.mxu0 0.0
  %1585 = vmatprep.subr.mxu0 0.0
  %1586 = vmatpush1.msra.mxu0 0.0
  %1587 = vmatprep.subr.mxu0 0.0
  %1588 = vmatpush1.msra.mxu0 0.0
  %1589 = vmatprep.subr.mxu0 0.0
  %1590 = vmatpush1.msra.mxu0 0.0
  %1591 = vmatprep.subr.mxu0 0.0
  %1592 = vmatpush1.msra.mxu0 0.0
  %1593 = vmatprep.subr.mxu0 0.0
  %1594 = vmatpush1.msra.mxu0 0.0
  %1595 = vmatprep.subr.mxu0 0.0
  %1596 = vmatpush1.msra.mxu0 0.0
  %1597 = vmatprep.mubr.f32.mxu0 0.0
  %v1598 = vand.u32 %v817, 4294901760
  %v1599 = vsub.f32 %v817, %v1598
  %v1600 = vand.u32 %v1599, 4294901760
  %1601 = vmatmul.mubr.f32.gmra.mrb[0].mxu0 %v1600
  %v1602 = vpop.f32.mrb[0].mxu0
  %v1603 = vadd.f32 %v1405, %v1602
  %v1604 = vpop.f32.mrb[0].mxu0
  %1605 = vmatprep.mubr.f32.mxu0 0.0
  %v1606 = vand.u32 %v820, 4294901760
  %v1607 = vsub.f32 %v820, %v1606
  %v1608 = vand.u32 %v1607, 4294901760
  %1609 = vmatmul.mubr.f32.gmra.mrb[0].mxu0 %v1608
  %v1610 = vpop.f32.mrb[0].mxu0
  %v1611 = vadd.f32 %v1412, %v1610
  %v1612 = vpop.f32.mrb[0].mxu0
  %1613 = vmatprep.mubr.f32.mxu0 0.0
  %v1614 = vand.u32 %v823, 4294901760
  %v1615 = vsub.f32 %v823, %v1614
  %v1616 = vand.u32 %v1615, 4294901760
  %1617 = vmatmul.mubr.f32.gmra.mrb[0].mxu0 %v1616
  %v1618 = vpop.f32.mrb[0].mxu0
  %v1619 = vadd.f32 %v1419, %v1618
  %v1620 = vpop.f32.mrb[0].mxu0
  %1621 = vmatprep.mubr.f32.mxu0 0.0
  %v1622 = vand.u32 %v826, 4294901760
  %v1623 = vsub.f32 %v826, %v1622
  %v1624 = vand.u32 %v1623, 4294901760
  %1625 = vmatmul.mubr.f32.gmra.mrb[0].mxu0 %v1624
  %v1626 = vpop.f32.mrb[0].mxu0
  %v1627 = vadd.f32 %v1426, %v1626
  %v1628 = vpop.f32.mrb[0].mxu0
  %1629 = vmatprep.mubr.f32.mxu0 0.0
  %v1630 = vand.u32 %v829, 4294901760
  %v1631 = vsub.f32 %v829, %v1630
  %v1632 = vand.u32 %v1631, 4294901760
  %1633 = vmatmul.mubr.f32.gmra.mrb[0].mxu0 %v1632
  %v1634 = vpop.f32.mrb[0].mxu0
  %v1635 = vadd.f32 %v1433, %v1634
  %v1636 = vpop.f32.mrb[0].mxu0
  %1637 = vmatprep.mubr.f32.mxu0 0.0
  %v1638 = vand.u32 %v832, 4294901760
  %v1639 = vsub.f32 %v832, %v1638
  %v1640 = vand.u32 %v1639, 4294901760
  %1641 = vmatmul.mubr.f32.gmra.mrb[0].mxu0 %v1640
  %v1642 = vpop.f32.mrb[0].mxu0
  %v1643 = vadd.f32 %v1440, %v1642
  %v1644 = vpop.f32.mrb[0].mxu0
  %1645 = vmatprep.mubr.f32.mxu0 0.0
  %v1646 = vand.u32 %v835, 4294901760
  %v1647 = vsub.f32 %v835, %v1646
  %v1648 = vand.u32 %v1647, 4294901760
  %1649 = vmatmul.mubr.f32.gmra.mrb[0].mxu0 %v1648
  %v1650 = vpop.f32.mrb[0].mxu0
  %v1651 = vadd.f32 %v1447, %v1650
  %v1652 = vpop.f32.mrb[0].mxu0
  %1653 = vmatprep.mubr.f32.mxu0 0.0
  %v1654 = vand.u32 %v838, 4294901760
  %v1655 = vsub.f32 %v838, %v1654
  %v1656 = vand.u32 %v1655, 4294901760
  %1657 = vmatmul.mubr.f32.gmra.mrb[0].mxu0 %v1656
  %v1658 = vpop.f32.mrb[0].mxu0
  %v1659 = vadd.f32 %v1454, %v1658
  %v1660 = vpop.f32.mrb[0].mxu0
  %1661 = vmatprep.mubr.f32.mxu0 0.0
  %v1662 = vand.u32 %v841, 4294901760
  %v1663 = vsub.f32 %v841, %v1662
  %v1664 = vand.u32 %v1663, 4294901760
  %1665 = vmatmul.mubr.f32.gmra.mrb[0].mxu0 %v1664
  %v1666 = vpop.f32.mrb[0].mxu0
  %v1667 = vadd.f32 %v1461, %v1666
  %v1668 = vpop.f32.mrb[0].mxu0
  %1669 = vmatprep.mubr.f32.mxu0 0.0
  %v1670 = vand.u32 %v844, 4294901760
  %v1671 = vsub.f32 %v844, %v1670
  %v1672 = vand.u32 %v1671, 4294901760
  %1673 = vmatmul.mubr.f32.gmra.mrb[0].mxu0 %v1672
  %v1674 = vpop.f32.mrb[0].mxu0
  %v1675 = vadd.f32 %v1468, %v1674
  %v1676 = vpop.f32.mrb[0].mxu0
  %1677 = vmatprep.mubr.f32.mxu0 0.0
  %v1678 = vand.u32 %v847, 4294901760
  %v1679 = vsub.f32 %v847, %v1678
  %v1680 = vand.u32 %v1679, 4294901760
  %1681 = vmatmul.mubr.f32.gmra.mrb[0].mxu0 %v1680
  %v1682 = vpop.f32.mrb[0].mxu0
  %v1683 = vadd.f32 %v1475, %v1682
  %v1684 = vpop.f32.mrb[0].mxu0
  %1685 = vmatprep.mubr.f32.mxu0 0.0
  %v1686 = vand.u32 %v850, 4294901760
  %v1687 = vsub.f32 %v850, %v1686
  %v1688 = vand.u32 %v1687, 4294901760
  %1689 = vmatmul.mubr.f32.gmra.mrb[0].mxu0 %v1688
  %v1690 = vpop.f32.mrb[0].mxu0
  %v1691 = vadd.f32 %v1482, %v1690
  %v1692 = vpop.f32.mrb[0].mxu0
  %1693 = vmatprep.mubr.f32.mxu0 0.0
  %v1694 = vand.u32 %v853, 4294901760
  %v1695 = vsub.f32 %v853, %v1694
  %v1696 = vand.u32 %v1695, 4294901760
  %1697 = vmatmul.mubr.f32.gmra.mrb[0].mxu0 %v1696
  %v1698 = vpop.f32.mrb[0].mxu0
  %v1699 = vadd.f32 %v1489, %v1698
  %v1700 = vpop.f32.mrb[0].mxu0
  %1701 = vmatprep.mubr.f32.mxu0 0.0
  %v1702 = vand.u32 %v856, 4294901760
  %v1703 = vsub.f32 %v856, %v1702
  %v1704 = vand.u32 %v1703, 4294901760
  %1705 = vmatmul.mubr.f32.gmra.mrb[0].mxu0 %v1704
  %v1706 = vpop.f32.mrb[0].mxu0
  %v1707 = vadd.f32 %v1496, %v1706
  %v1708 = vpop.f32.mrb[0].mxu0
  %1709 = vmatprep.mubr.f32.mxu0 0.0
  %v1710 = vand.u32 %v859, 4294901760
  %v1711 = vsub.f32 %v859, %v1710
  %v1712 = vand.u32 %v1711, 4294901760
  %1713 = vmatmul.mubr.f32.gmra.mrb[0].mxu0 %v1712
  %v1714 = vpop.f32.mrb[0].mxu0
  %v1715 = vadd.f32 %v1503, %v1714
  %v1716 = vpop.f32.mrb[0].mxu0
  %1717 = vmatprep.mubr.f32.mxu0 0.0
  %v1718 = vand.u32 %v862, 4294901760
  %v1719 = vsub.f32 %v862, %v1718
  %v1720 = vand.u32 %v1719, 4294901760
  %1721 = vmatmul.mubr.f32.gmra.mrb[0].mxu0 %v1720
  %v1722 = vpop.f32.mrb[0].mxu0
  %v1723 = vadd.f32 %v1510, %v1722
  %v1724 = vpop.f32.mrb[0].mxu0
  %1725 = vmatprep.mubr.f32.mxu0 0.0
  %v1726 = vand.u32 %v865, 4294901760
  %v1727 = vsub.f32 %v865, %v1726
  %v1728 = vand.u32 %v1727, 4294901760
  %1729 = vmatmul.mubr.f32.gmra.mrb[0].mxu0 %v1728
  %v1730 = vpop.f32.mrb[0].mxu0
  %v1731 = vadd.f32 %v1517, %v1730
  %v1732 = vpop.f32.mrb[0].mxu0
  %1733 = vmatprep.mubr.f32.mxu0 0.0
  %v1734 = vand.u32 %v868, 4294901760
  %v1735 = vsub.f32 %v868, %v1734
  %v1736 = vand.u32 %v1735, 4294901760
  %1737 = vmatmul.mubr.f32.gmra.mrb[0].mxu0 %v1736
  %v1738 = vpop.f32.mrb[0].mxu0
  %v1739 = vadd.f32 %v1524, %v1738
  %v1740 = vpop.f32.mrb[0].mxu0
  %1741 = vdwg.mxu0
  %1742 = vmatprep.subr.mxu0 0.0
  %v1743 = vand.u32 %v782, 4294901760
  %v1744 = vsub.f32 %v782, %v1743
  %v1745 = vand.u32 %v1744, 4294901760
  %1746 = vmatpush1.msra.mxu0 %v1745
  %1747 = vmatprep.subr.mxu0 0.0
  %v1748 = vand.u32 %v788, 4294901760
  %v1749 = vsub.f32 %v788, %v1748
  %v1750 = vand.u32 %v1749, 4294901760
  %1751 = vmatpush1.msra.mxu0 %v1750
  %1752 = vmatprep.subr.mxu0 0.0
  %v1753 = vand.u32 %v794, 4294901760
  %v1754 = vsub.f32 %v794, %v1753
  %v1755 = vand.u32 %v1754, 4294901760
  %1756 = vmatpush1.msra.mxu0 %v1755
  %1757 = vmatprep.subr.mxu0 0.0
  %v1758 = vand.u32 %v800, 4294901760
  %v1759 = vsub.f32 %v800, %v1758
  %v1760 = vand.u32 %v1759, 4294901760
  %1761 = vmatpush1.msra.mxu0 %v1760
  %1762 = vmatprep.subr.mxu0 0.0
  %v1763 = vand.u32 %v806, 4294901760
  %v1764 = vsub.f32 %v806, %v1763
  %v1765 = vand.u32 %v1764, 4294901760
  %1766 = vmatpush1.msra.mxu0 %v1765
  %1767 = vmatprep.subr.mxu0 0.0
  %v1768 = vand.u32 %v812, 4294901760
  %v1769 = vsub.f32 %v812, %v1768
  %v1770 = vand.u32 %v1769, 4294901760
  %1771 = vmatpush1.msra.mxu0 %v1770
  %1772 = vmatprep.subr.mxu0 0.0
  %1773 = vmatpush1.msra.mxu0 0.0
  %1774 = vmatprep.subr.mxu0 0.0
  %1775 = vmatpush1.msra.mxu0 0.0
  %1776 = vmatprep.subr.mxu0 0.0
  %1777 = vmatpush1.msra.mxu0 0.0
  %1778 = vmatprep.subr.mxu0 0.0
  %1779 = vmatpush1.msra.mxu0 0.0
  %1780 = vmatprep.subr.mxu0 0.0
  %1781 = vmatpush1.msra.mxu0 0.0
  %1782 = vmatprep.subr.mxu0 0.0
  %1783 = vmatpush1.msra.mxu0 0.0
  %1784 = vmatprep.subr.mxu0 0.0
  %1785 = vmatpush1.msra.mxu0 0.0
  %1786 = vmatprep.subr.mxu0 0.0
  %1787 = vmatpush1.msra.mxu0 0.0
  %1788 = vmatprep.subr.mxu0 0.0
  %1789 = vmatpush1.msra.mxu0 0.0
  %1790 = vmatprep.subr.mxu0 0.0
  %1791 = vmatpush1.msra.mxu0 0.0
  %1792 = vmatprep.subr.mxu0 0.0
  %1793 = vmatpush1.msra.mxu0 0.0
  %1794 = vmatprep.subr.mxu0 0.0
  %1795 = vmatpush1.msra.mxu0 0.0
  %1796 = vmatprep.subr.mxu0 0.0
  %1797 = vmatpush1.msra.mxu0 0.0
  %1798 = vmatprep.subr.mxu0 0.0
  %1799 = vmatpush1.msra.mxu0 0.0
  %1800 = vmatprep.subr.mxu0 0.0
  %1801 = vmatpush1.msra.mxu0 0.0
  %1802 = vmatprep.subr.mxu0 0.0
  %1803 = vmatpush1.msra.mxu0 0.0
  %1804 = vmatprep.subr.mxu0 0.0
  %1805 = vmatpush1.msra.mxu0 0.0
  %1806 = vmatprep.subr.mxu0 0.0
  %1807 = vmatpush1.msra.mxu0 0.0
  %1808 = vmatprep.subr.mxu0 0.0
  %1809 = vmatpush1.msra.mxu0 0.0
  %1810 = vmatprep.subr.mxu0 0.0
  %1811 = vmatpush1.msra.mxu0 0.0
  %1812 = vmatprep.subr.mxu0 0.0
  %1813 = vmatpush1.msra.mxu0 0.0
  %1814 = vmatprep.subr.mxu0 0.0
  %1815 = vmatpush1.msra.mxu0 0.0
  %1816 = vmatprep.subr.mxu0 0.0
  %1817 = vmatpush1.msra.mxu0 0.0
  %1818 = vmatprep.subr.mxu0 0.0
  %1819 = vmatpush1.msra.mxu0 0.0
  %1820 = vmatprep.subr.mxu0 0.0
  %1821 = vmatpush1.msra.mxu0 0.0
  %1822 = vmatprep.subr.mxu0 0.0
  %1823 = vmatpush1.msra.mxu0 0.0
  %1824 = vmatprep.mubr.f32.mxu0 0.0
  %v1825 = vand.u32 %v817, 4294901760
  %1826 = vmatmul.mubr.f32.gmra.mrb[0].mxu0 %v1825
  %v1827 = vpop.f32.mrb[0].mxu0
  %v1828 = vadd.f32 %v1603, %v1827
  %v1829 = vpop.f32.mrb[0].mxu0
  %1830 = vmatprep.mubr.f32.mxu0 0.0
  %v1831 = vand.u32 %v820, 4294901760
  %1832 = vmatmul.mubr.f32.gmra.mrb[0].mxu0 %v1831
  %v1833 = vpop.f32.mrb[0].mxu0
  %v1834 = vadd.f32 %v1611, %v1833
  %v1835 = vpop.f32.mrb[0].mxu0
  %1836 = vmatprep.mubr.f32.mxu0 0.0
  %v1837 = vand.u32 %v823, 4294901760
  %1838 = vmatmul.mubr.f32.gmra.mrb[0].mxu0 %v1837
  %v1839 = vpop.f32.mrb[0].mxu0
  %v1840 = vadd.f32 %v1619, %v1839
  %v1841 = vpop.f32.mrb[0].mxu0
  %1842 = vmatprep.mubr.f32.mxu0 0.0
  %v1843 = vand.u32 %v826, 4294901760
  %1844 = vmatmul.mubr.f32.gmra.mrb[0].mxu0 %v1843
  %v1845 = vpop.f32.mrb[0].mxu0
  %v1846 = vadd.f32 %v1627, %v1845
  %v1847 = vpop.f32.mrb[0].mxu0
  %1848 = vmatprep.mubr.f32.mxu0 0.0
  %v1849 = vand.u32 %v829, 4294901760
  %1850 = vmatmul.mubr.f32.gmra.mrb[0].mxu0 %v1849
  %v1851 = vpop.f32.mrb[0].mxu0
  %v1852 = vadd.f32 %v1635, %v1851
  %v1853 = vpop.f32.mrb[0].mxu0
  %1854 = vmatprep.mubr.f32.mxu0 0.0
  %v1855 = vand.u32 %v832, 4294901760
  %1856 = vmatmul.mubr.f32.gmra.mrb[0].mxu0 %v1855
  %v1857 = vpop.f32.mrb[0].mxu0
  %v1858 = vadd.f32 %v1643, %v1857
  %v1859 = vpop.f32.mrb[0].mxu0
  %1860 = vmatprep.mubr.f32.mxu0 0.0
  %v1861 = vand.u32 %v835, 4294901760
  %1862 = vmatmul.mubr.f32.gmra.mrb[0].mxu0 %v1861
  %v1863 = vpop.f32.mrb[0].mxu0
  %v1864 = vadd.f32 %v1651, %v1863
  %v1865 = vpop.f32.mrb[0].mxu0
  %1866 = vmatprep.mubr.f32.mxu0 0.0
  %v1867 = vand.u32 %v838, 4294901760
  %1868 = vmatmul.mubr.f32.gmra.mrb[0].mxu0 %v1867
  %v1869 = vpop.f32.mrb[0].mxu0
  %v1870 = vadd.f32 %v1659, %v1869
  %v1871 = vpop.f32.mrb[0].mxu0
  %1872 = vmatprep.mubr.f32.mxu0 0.0
  %v1873 = vand.u32 %v841, 4294901760
  %1874 = vmatmul.mubr.f32.gmra.mrb[0].mxu0 %v1873
  %v1875 = vpop.f32.mrb[0].mxu0
  %v1876 = vadd.f32 %v1667, %v1875
  %v1877 = vpop.f32.mrb[0].mxu0
  %1878 = vmatprep.mubr.f32.mxu0 0.0
  %v1879 = vand.u32 %v844, 4294901760
  %1880 = vmatmul.mubr.f32.gmra.mrb[0].mxu0 %v1879
  %v1881 = vpop.f32.mrb[0].mxu0
  %v1882 = vadd.f32 %v1675, %v1881
  %v1883 = vpop.f32.mrb[0].mxu0
  %1884 = vmatprep.mubr.f32.mxu0 0.0
  %v1885 = vand.u32 %v847, 4294901760
  %1886 = vmatmul.mubr.f32.gmra.mrb[0].mxu0 %v1885
  %v1887 = vpop.f32.mrb[0].mxu0
  %v1888 = vadd.f32 %v1683, %v1887
  %v1889 = vpop.f32.mrb[0].mxu0
  %1890 = vmatprep.mubr.f32.mxu0 0.0
  %v1891 = vand.u32 %v850, 4294901760
  %1892 = vmatmul.mubr.f32.gmra.mrb[0].mxu0 %v1891
  %v1893 = vpop.f32.mrb[0].mxu0
  %v1894 = vadd.f32 %v1691, %v1893
  %v1895 = vpop.f32.mrb[0].mxu0
  %1896 = vmatprep.mubr.f32.mxu0 0.0
  %v1897 = vand.u32 %v853, 4294901760
  %1898 = vmatmul.mubr.f32.gmra.mrb[0].mxu0 %v1897
  %v1899 = vpop.f32.mrb[0].mxu0
  %v1900 = vadd.f32 %v1699, %v1899
  %v1901 = vpop.f32.mrb[0].mxu0
  %1902 = vmatprep.mubr.f32.mxu0 0.0
  %v1903 = vand.u32 %v856, 4294901760
  %1904 = vmatmul.mubr.f32.gmra.mrb[0].mxu0 %v1903
  %v1905 = vpop.f32.mrb[0].mxu0
  %v1906 = vadd.f32 %v1707, %v1905
  %v1907 = vpop.f32.mrb[0].mxu0
  %1908 = vmatprep.mubr.f32.mxu0 0.0
  %v1909 = vand.u32 %v859, 4294901760
  %1910 = vmatmul.mubr.f32.gmra.mrb[0].mxu0 %v1909
  %v1911 = vpop.f32.mrb[0].mxu0
  %v1912 = vadd.f32 %v1715, %v1911
  %v1913 = vpop.f32.mrb[0].mxu0
  %1914 = vmatprep.mubr.f32.mxu0 0.0
  %v1915 = vand.u32 %v862, 4294901760
  %1916 = vmatmul.mubr.f32.gmra.mrb[0].mxu0 %v1915
  %v1917 = vpop.f32.mrb[0].mxu0
  %v1918 = vadd.f32 %v1723, %v1917
  %v1919 = vpop.f32.mrb[0].mxu0
  %1920 = vmatprep.mubr.f32.mxu0 0.0
  %v1921 = vand.u32 %v865, 4294901760
  %1922 = vmatmul.mubr.f32.gmra.mrb[0].mxu0 %v1921
  %v1923 = vpop.f32.mrb[0].mxu0
  %v1924 = vadd.f32 %v1731, %v1923
  %v1925 = vpop.f32.mrb[0].mxu0
  %1926 = vmatprep.mubr.f32.mxu0 0.0
  %v1927 = vand.u32 %v868, 4294901760
  %1928 = vmatmul.mubr.f32.gmra.mrb[0].mxu0 %v1927
  %v1929 = vpop.f32.mrb[0].mxu0
  %v1930 = vadd.f32 %v1739, %v1929
  %v1931 = vpop.f32.mrb[0].mxu0
  %1932 = vdwg.mxu0
  %1933 = vmatprep.subr.mxu0 0.0
  %v1934 = vand.u32 %v782, 4294901760
  %1935 = vmatpush1.msra.mxu0 %v1934
  %1936 = vmatprep.subr.mxu0 0.0
  %v1937 = vand.u32 %v788, 4294901760
  %1938 = vmatpush1.msra.mxu0 %v1937
  %1939 = vmatprep.subr.mxu0 0.0
  %v1940 = vand.u32 %v794, 4294901760
  %1941 = vmatpush1.msra.mxu0 %v1940
  %1942 = vmatprep.subr.mxu0 0.0
  %v1943 = vand.u32 %v800, 4294901760
  %1944 = vmatpush1.msra.mxu0 %v1943
  %1945 = vmatprep.subr.mxu0 0.0
  %v1946 = vand.u32 %v806, 4294901760
  %1947 = vmatpush1.msra.mxu0 %v1946
  %1948 = vmatprep.subr.mxu0 0.0
  %v1949 = vand.u32 %v812, 4294901760
  %1950 = vmatpush1.msra.mxu0 %v1949
  %1951 = vmatprep.subr.mxu0 0.0
  %1952 = vmatpush1.msra.mxu0 0.0
  %1953 = vmatprep.subr.mxu0 0.0
  %1954 = vmatpush1.msra.mxu0 0.0
  %1955 = vmatprep.subr.mxu0 0.0
  %1956 = vmatpush1.msra.mxu0 0.0
  %1957 = vmatprep.subr.mxu0 0.0
  %1958 = vmatpush1.msra.mxu0 0.0
  %1959 = vmatprep.subr.mxu0 0.0
  %1960 = vmatpush1.msra.mxu0 0.0
  %1961 = vmatprep.subr.mxu0 0.0
  %1962 = vmatpush1.msra.mxu0 0.0
  %1963 = vmatprep.subr.mxu0 0.0
  %1964 = vmatpush1.msra.mxu0 0.0
  %1965 = vmatprep.subr.mxu0 0.0
  %1966 = vmatpush1.msra.mxu0 0.0
  %1967 = vmatprep.subr.mxu0 0.0
  %1968 = vmatpush1.msra.mxu0 0.0
  %1969 = vmatprep.subr.mxu0 0.0
  %1970 = vmatpush1.msra.mxu0 0.0
  %1971 = vmatprep.subr.mxu0 0.0
  %1972 = vmatpush1.msra.mxu0 0.0
  %1973 = vmatprep.subr.mxu0 0.0
  %1974 = vmatpush1.msra.mxu0 0.0
  %1975 = vmatprep.subr.mxu0 0.0
  %1976 = vmatpush1.msra.mxu0 0.0
  %1977 = vmatprep.subr.mxu0 0.0
  %1978 = vmatpush1.msra.mxu0 0.0
  %1979 = vmatprep.subr.mxu0 0.0
  %1980 = vmatpush1.msra.mxu0 0.0
  %1981 = vmatprep.subr.mxu0 0.0
  %1982 = vmatpush1.msra.mxu0 0.0
  %1983 = vmatprep.subr.mxu0 0.0
  %1984 = vmatpush1.msra.mxu0 0.0
  %1985 = vmatprep.subr.mxu0 0.0
  %1986 = vmatpush1.msra.mxu0 0.0
  %1987 = vmatprep.subr.mxu0 0.0
  %1988 = vmatpush1.msra.mxu0 0.0
  %1989 = vmatprep.subr.mxu0 0.0
  %1990 = vmatpush1.msra.mxu0 0.0
  %1991 = vmatprep.subr.mxu0 0.0
  %1992 = vmatpush1.msra.mxu0 0.0
  %1993 = vmatprep.subr.mxu0 0.0
  %1994 = vmatpush1.msra.mxu0 0.0
  %1995 = vmatprep.subr.mxu0 0.0
  %1996 = vmatpush1.msra.mxu0 0.0
  %1997 = vmatprep.subr.mxu0 0.0
  %1998 = vmatpush1.msra.mxu0 0.0
  %1999 = vmatprep.subr.mxu0 0.0
  %2000 = vmatpush1.msra.mxu0 0.0
  %2001 = vmatprep.subr.mxu0 0.0
  %2002 = vmatpush1.msra.mxu0 0.0
  %2003 = vmatprep.mubr.f32.mxu0 0.0
  %v2004 = vand.u32 %v817, 4294901760
  %2005 = vmatmul.mubr.f32.gmra.mrb[0].mxu0 %v2004
  %v2006 = vpop.f32.mrb[0].mxu0
  %v2007 = vadd.f32 %v1828, %v2006
  %v2008 = vpop.f32.mrb[0].mxu0
  %2009 = vmatprep.mubr.f32.mxu0 0.0
  %v2010 = vand.u32 %v820, 4294901760
  %2011 = vmatmul.mubr.f32.gmra.mrb[0].mxu0 %v2010
  %v2012 = vpop.f32.mrb[0].mxu0
  %v2013 = vadd.f32 %v1834, %v2012
  %v2014 = vpop.f32.mrb[0].mxu0
  %2015 = vmatprep.mubr.f32.mxu0 0.0
  %v2016 = vand.u32 %v823, 4294901760
  %2017 = vmatmul.mubr.f32.gmra.mrb[0].mxu0 %v2016
  %v2018 = vpop.f32.mrb[0].mxu0
  %v2019 = vadd.f32 %v1840, %v2018
  %v2020 = vpop.f32.mrb[0].mxu0
  %2021 = vmatprep.mubr.f32.mxu0 0.0
  %v2022 = vand.u32 %v826, 4294901760
  %2023 = vmatmul.mubr.f32.gmra.mrb[0].mxu0 %v2022
  %v2024 = vpop.f32.mrb[0].mxu0
  %v2025 = vadd.f32 %v1846, %v2024
  %v2026 = vpop.f32.mrb[0].mxu0
  %2027 = vmatprep.mubr.f32.mxu0 0.0
  %v2028 = vand.u32 %v829, 4294901760
  %2029 = vmatmul.mubr.f32.gmra.mrb[0].mxu0 %v2028
  %v2030 = vpop.f32.mrb[0].mxu0
  %v2031 = vadd.f32 %v1852, %v2030
  %v2032 = vpop.f32.mrb[0].mxu0
  %2033 = vmatprep.mubr.f32.mxu0 0.0
  %v2034 = vand.u32 %v832, 4294901760
  %2035 = vmatmul.mubr.f32.gmra.mrb[0].mxu0 %v2034
  %v2036 = vpop.f32.mrb[0].mxu0
  %v2037 = vadd.f32 %v1858, %v2036
  %v2038 = vpop.f32.mrb[0].mxu0
  %2039 = vmatprep.mubr.f32.mxu0 0.0
  %v2040 = vand.u32 %v835, 4294901760
  %2041 = vmatmul.mubr.f32.gmra.mrb[0].mxu0 %v2040
  %v2042 = vpop.f32.mrb[0].mxu0
  %v2043 = vadd.f32 %v1864, %v2042
  %v2044 = vpop.f32.mrb[0].mxu0
  %2045 = vmatprep.mubr.f32.mxu0 0.0
  %v2046 = vand.u32 %v838, 4294901760
  %2047 = vmatmul.mubr.f32.gmra.mrb[0].mxu0 %v2046
  %v2048 = vpop.f32.mrb[0].mxu0
  %v2049 = vadd.f32 %v1870, %v2048
  %v2050 = vpop.f32.mrb[0].mxu0
  %2051 = vmatprep.mubr.f32.mxu0 0.0
  %v2052 = vand.u32 %v841, 4294901760
  %2053 = vmatmul.mubr.f32.gmra.mrb[0].mxu0 %v2052
  %v2054 = vpop.f32.mrb[0].mxu0
  %v2055 = vadd.f32 %v1876, %v2054
  %v2056 = vpop.f32.mrb[0].mxu0
  %2057 = vmatprep.mubr.f32.mxu0 0.0
  %v2058 = vand.u32 %v844, 4294901760
  %2059 = vmatmul.mubr.f32.gmra.mrb[0].mxu0 %v2058
  %v2060 = vpop.f32.mrb[0].mxu0
  %v2061 = vadd.f32 %v1882, %v2060
  %v2062 = vpop.f32.mrb[0].mxu0
  %2063 = vmatprep.mubr.f32.mxu0 0.0
  %v2064 = vand.u32 %v847, 4294901760
  %2065 = vmatmul.mubr.f32.gmra.mrb[0].mxu0 %v2064
  %v2066 = vpop.f32.mrb[0].mxu0
  %v2067 = vadd.f32 %v1888, %v2066
  %v2068 = vpop.f32.mrb[0].mxu0
  %2069 = vmatprep.mubr.f32.mxu0 0.0
  %v2070 = vand.u32 %v850, 4294901760
  %2071 = vmatmul.mubr.f32.gmra.mrb[0].mxu0 %v2070
  %v2072 = vpop.f32.mrb[0].mxu0
  %v2073 = vadd.f32 %v1894, %v2072
  %v2074 = vpop.f32.mrb[0].mxu0
  %2075 = vmatprep.mubr.f32.mxu0 0.0
  %v2076 = vand.u32 %v853, 4294901760
  %2077 = vmatmul.mubr.f32.gmra.mrb[0].mxu0 %v2076
  %v2078 = vpop.f32.mrb[0].mxu0
  %v2079 = vadd.f32 %v1900, %v2078
  %v2080 = vpop.f32.mrb[0].mxu0
  %2081 = vmatprep.mubr.f32.mxu0 0.0
  %v2082 = vand.u32 %v856, 4294901760
  %2083 = vmatmul.mubr.f32.gmra.mrb[0].mxu0 %v2082
  %v2084 = vpop.f32.mrb[0].mxu0
  %v2085 = vadd.f32 %v1906, %v2084
  %v2086 = vpop.f32.mrb[0].mxu0
  %2087 = vmatprep.mubr.f32.mxu0 0.0
  %v2088 = vand.u32 %v859, 4294901760
  %2089 = vmatmul.mubr.f32.gmra.mrb[0].mxu0 %v2088
  %v2090 = vpop.f32.mrb[0].mxu0
  %v2091 = vadd.f32 %v1912, %v2090
  %v2092 = vpop.f32.mrb[0].mxu0
  %2093 = vmatprep.mubr.f32.mxu0 0.0
  %v2094 = vand.u32 %v862, 4294901760
  %2095 = vmatmul.mubr.f32.gmra.mrb[0].mxu0 %v2094
  %v2096 = vpop.f32.mrb[0].mxu0
  %v2097 = vadd.f32 %v1918, %v2096
  %v2098 = vpop.f32.mrb[0].mxu0
  %2099 = vmatprep.mubr.f32.mxu0 0.0
  %v2100 = vand.u32 %v865, 4294901760
  %2101 = vmatmul.mubr.f32.gmra.mrb[0].mxu0 %v2100
  %v2102 = vpop.f32.mrb[0].mxu0
  %v2103 = vadd.f32 %v1924, %v2102
  %v2104 = vpop.f32.mrb[0].mxu0
  %2105 = vmatprep.mubr.f32.mxu0 0.0
  %v2106 = vand.u32 %v868, 4294901760
  %2107 = vmatmul.mubr.f32.gmra.mrb[0].mxu0 %v2106
  %v2108 = vpop.f32.mrb[0].mxu0
  %v2109 = vadd.f32 %v1930, %v2108
  %v2110 = vpop.f32.mrb[0].mxu0
  %2111 = vdwg.mxu0
  %2112 = vst.msk [vmem:[%s1] sm:$0xff] %vm815, %v2007
  %2113 = vst.msk [vmem:[%s1 + $0x8] sm:$0xff] %vm815, %v2013
  %2114 = vst.msk [vmem:[%s1 + $0x10] sm:$0xff] %vm815, %v2019
  %2115 = vst.msk [vmem:[%s1 + $0x18] sm:$0xff] %vm815, %v2025
  %2116 = vst.msk [vmem:[%s1 + $0x20] sm:$0xff] %vm815, %v2031
  %2117 = vst.msk [vmem:[%s1 + $0x28] sm:$0xff] %vm815, %v2037
  %2118 = vst.msk [vmem:[%s1 + $0x30] sm:$0xff] %vm815, %v2043
  %2119 = vst.msk [vmem:[%s1 + $0x38] sm:$0xff] %vm815, %v2049
  %2120 = vst.msk [vmem:[%s1 + $0x40] sm:$0xff] %vm815, %v2055
  %2121 = vst.msk [vmem:[%s1 + $0x48] sm:$0xff] %vm815, %v2061
  %2122 = vst.msk [vmem:[%s1 + $0x50] sm:$0xff] %vm815, %v2067
  %2123 = vst.msk [vmem:[%s1 + $0x58] sm:$0xff] %vm815, %v2073
  %2124 = vst.msk [vmem:[%s1 + $0x60] sm:$0xff] %vm815, %v2079
  %2125 = vst.msk [vmem:[%s1 + $0x68] sm:$0xff] %vm815, %v2085
  %2126 = vst.msk [vmem:[%s1 + $0x70] sm:$0xff] %vm815, %v2091
  %2127 = vst.msk [vmem:[%s1 + $0x78] sm:$0xff] %vm815, %v2097
  %2128 = vst.msk [vmem:[%s1 + $0x80] sm:$0xff] %vm815, %v2103
  %2129 = vst.msk [vmem:[%s1 + $0x88] sm:$0xff] %vm815, %v2109
  // Predicated region
  $region6: #{upsample_nearest2d.1} parent=0 // pred_check
    _
  $region7: #{upsample_nearest2d.1} parent=0 // pred_check_branch
    %2131 = sbr.rel (0) target = $region9
  $region8: #{upsample_nearest2d.1} parent=0 // pred_region
    _
  $region9: #{upsample_nearest2d.1} parent=0 // pred_fallthru
    _
  // Predicated region
  $region10: #{upsample_nearest2d.1} parent=0 // pred_check
    _
  $region11: #{upsample_nearest2d.1} parent=0 // pred_check_branch
    %2133 = sbr.rel (0) target = $region13
  $region12: #{upsample_nearest2d.1} parent=0 // pred_region
    _
  $region13: #{upsample_nearest2d.1} parent=0 // pred_fallthru
    _

</llo_original>
